<compile_context>
chip_gen: v6e
topology: v6e:2x2x1
jax: 0.10.0
libtpu: 0.0.40
codegen_flags: <defaults>
</compile_context>

<pallas_src>
import functools

import jax
import jax.numpy as jnp
from jax.experimental import pallas as pl
from jax.experimental.pallas import tpu as pltpu

N_DATASETS = 3      # len(cfg.num_classes)
REDUCTION = 16      # DomainAttention / SELayer reduction
LANE = 128
LEAD = 8            # zero lead rows in the padded conv1 VMEM buffer (8-aligned)


def _round_up(x, m):
    return ((x + m - 1) // m) * m


def _vmem_limit_bytes():
    """Generation-aware VMEM budget (v5e/v6e: 128 MiB physical, v7x: 64 MiB)."""
    try:
        cap = int(pltpu.get_tpu_info().vmem_capacity_bytes)
    except Exception:
        cap = 64 * 1024 * 1024
    return max(16 * 1024 * 1024, min(int(cap * 0.6), 96 * 1024 * 1024))


def _pick_row_tile(H, Wr, c3_p):
    """HW tile (in pitched rows) for the conv3/gate kernels: a multiple of Wr
    that divides H*Wr, sized so per-block bytes stay moderate."""
    cap = max(Wr, min(1024, (4 * 1024 * 1024) // (4 * c3_p)))
    best = 1
    for rh in range(1, H + 1):
        if H % rh == 0 and rh * Wr <= cap:
            best = rh
    return best * Wr


# -----------------------------------------------------------------------------
# Kernel A: conv1 (1x1, BN1 folded) + ReLU fused with conv2 (3x3 pad=1, BN2
# folded) + ReLU.  The conv1 output never leaves VMEM: it is written into a
# zero-bordered, spatially padded buffer; conv2 is three fused-K GEMMs
# (K = 3*Cin), one per kernel row, with kx = 0/1/2 taps at row offsets -1/0/+1.
# -----------------------------------------------------------------------------
def conv12_kernel(x_ref, mask_ref, w1_ref, b1_ref, w2_ref, b2_ref, o_ref,
                  pbuf_ref, *, Wr):
    Hw, pl_p = o_ref.shape

    # conv1 over the pitched rows; zero the pitch-gap rows (w >= W) so the
    # padded buffer keeps its zero border invariant.
    a1 = jnp.dot(x_ref[...], w1_ref[...], preferred_element_type=jnp.float32)
    a1 = jnp.maximum(a1 + b1_ref[...], 0.0) * mask_ref[...]

    # padded conv1 image in VMEM: row (LEAD + hp*Wr + w) holds out1[hp-1, w];
    # the lead, border row blocks and pitch gaps are all zero.
    pbuf_ref[...] = jnp.zeros_like(pbuf_ref)
    pbuf_ref[pl.ds(LEAD + Wr, Hw), :] = a1.astype(pbuf_ref.dtype)

    # conv2: one fused-K GEMM per kernel row.
    acc = jnp.zeros((Hw, pl_p), jnp.float32)
    for ky in range(3):
        base = LEAD + ky * Wr                      # multiple of 8 (aligned)
        patch = jnp.concatenate(
            [pbuf_ref[pl.ds(base - 1, Hw), :],
             pbuf_ref[pl.ds(base, Hw), :],
             pbuf_ref[pl.ds(base + 1, Hw), :]], axis=-1)
        acc = acc + jnp.dot(patch, w2_ref[ky],
                            preferred_element_type=jnp.float32)
    o_ref[...] = jnp.maximum(acc + b2_ref[...], 0.0).astype(o_ref.dtype)


def conv1_conv2(x_pit, mask, w1, b1, w2, b2, *, H, Wr):
    B, Hw, cin_p = x_pit.shape
    pl_p = w1.shape[1]
    prows = LEAD + (H + 2) * Wr + LEAD
    flops = 2 * B * Hw * cin_p * pl_p + 2 * B * Hw * 9 * pl_p * pl_p
    return pl.pallas_call(
        functools.partial(conv12_kernel, Wr=Wr),
        out_shape=jax.ShapeDtypeStruct((B, Hw, pl_p), jnp.bfloat16),
        grid=(B,),
        in_specs=[
            pl.BlockSpec((None, Hw, cin_p), lambda b: (b, 0, 0)),
            pl.BlockSpec((Hw, 1), lambda b: (0, 0)),
            pl.BlockSpec((cin_p, pl_p), lambda b: (0, 0)),
            pl.BlockSpec((1, pl_p), lambda b: (0, 0)),
            pl.BlockSpec((3, 3 * pl_p, pl_p), lambda b: (0, 0, 0)),
            pl.BlockSpec((1, pl_p), lambda b: (0, 0)),
        ],
        out_specs=pl.BlockSpec((None, Hw, pl_p), lambda b: (b, 0, 0)),
        scratch_shapes=[pltpu.VMEM((prows, pl_p), jnp.bfloat16)],
        compiler_params=pltpu.CompilerParams(
            dimension_semantics=("parallel",),
            vmem_limit_bytes=_vmem_limit_bytes()),
        cost_estimate=pl.CostEstimate(
            flops=int(flops), transcendentals=0,
            bytes_accessed=int(B * Hw * cin_p * 2 + cin_p * pl_p * 2
                               + 9 * pl_p * pl_p * 2 + B * Hw * pl_p * 2)),
    )(x_pit, mask, w1, b1, w2, b2)


# -----------------------------------------------------------------------------
# Kernel B: conv3 (1x1, BN3 folded) fused with the DomainAttention global
# average pool (f32, masked for pitch gaps) and the softmax / batched-SE gate.
# Grid = (B, HW-tiles); the HW axis is an "arbitrary" reduction axis; the gate
# is produced at the last HW step.
# -----------------------------------------------------------------------------
def conv3_da_kernel(x_ref, mask_ref, w3_ref, b3_ref, fc1w_ref, fc1b_ref,
                    w1c_ref, b1c_ref, w2c_ref, b2a_ref,
                    out3_ref, gate_ref, pool_acc, *, n_valid, n_adapters, hid):
    j = pl.program_id(1)

    @pl.when(j == 0)
    def _():
        pool_acc[...] = jnp.zeros_like(pool_acc)

    acc = jnp.dot(x_ref[...], w3_ref[...],
                  preferred_element_type=jnp.float32) + b3_ref[...]
    out3_ref[...] = acc.astype(out3_ref.dtype)
    # masked global-average-pool accumulation (f32, excludes pitch-gap rows)
    pool_acc[...] += jnp.sum(acc * mask_ref[...], axis=0, keepdims=True)

    @pl.when(j == pl.num_programs(1) - 1)
    def _():
        pooled = pool_acc[...] * (1.0 / n_valid)                     # (1, C)
        logits = jnp.dot(pooled, fc1w_ref[...],
                         preferred_element_type=jnp.float32) + fc1b_ref[...]
        e = jnp.exp(logits - jnp.max(logits, axis=-1, keepdims=True))
        wts = e / jnp.sum(e, axis=-1, keepdims=True)                 # (1, nA)
        # all SE adapters batched into two GEMMs
        h = jnp.maximum(
            jnp.dot(pooled, w1c_ref[...],
                    preferred_element_type=jnp.float32) + b1c_ref[...], 0.0)
        seg = jnp.concatenate(
            [jnp.broadcast_to(wts[:, i:i + 1], (1, hid))
             for i in range(n_adapters)], axis=-1)                   # (1, nA*hid)
        gate_pre = jnp.dot(h * seg, w2c_ref[...],
                           preferred_element_type=jnp.float32)
        for i in range(n_adapters):
            gate_pre = gate_pre + wts[:, i:i + 1] * b2a_ref[pl.ds(i, 1), :]
        gate_ref[...] = 1.0 / (1.0 + jnp.exp(-gate_pre))             # sigmoid


def conv3_da_gate(out2, mask, w3, b3, fc1w, fc1b, w1c, b1c, w2c, b2a,
                  *, n_valid, thw):
    B, Hw, pl_p = out2.shape
    c3_p = w3.shape[1]
    nA = b2a.shape[0]
    hid = b1c.shape[1] // nA
    n_hw = Hw // thw
    return pl.pallas_call(
        functools.partial(conv3_da_kernel, n_valid=n_valid,
                          n_adapters=nA, hid=hid),
        out_shape=(jax.ShapeDtypeStruct((B, Hw, c3_p), jnp.bfloat16),
                   jax.ShapeDtypeStruct((B, 1, c3_p), jnp.float32)),
        grid=(B, n_hw),
        in_specs=[
            pl.BlockSpec((None, thw, pl_p), lambda b, j: (b, j, 0)),
            pl.BlockSpec((thw, 1), lambda b, j: (j, 0)),
            pl.BlockSpec((pl_p, c3_p), lambda b, j: (0, 0)),
            pl.BlockSpec((1, c3_p), lambda b, j: (0, 0)),
            pl.BlockSpec(fc1w.shape, lambda b, j: (0, 0)),
            pl.BlockSpec(fc1b.shape, lambda b, j: (0, 0)),
            pl.BlockSpec(w1c.shape, lambda b, j: (0, 0)),
            pl.BlockSpec(b1c.shape, lambda b, j: (0, 0)),
            pl.BlockSpec(w2c.shape, lambda b, j: (0, 0)),
            pl.BlockSpec(b2a.shape, lambda b, j: (0, 0)),
        ],
        out_specs=(pl.BlockSpec((None, thw, c3_p), lambda b, j: (b, j, 0)),
                   pl.BlockSpec((None, 1, c3_p), lambda b, j: (b, 0, 0))),
        scratch_shapes=[pltpu.VMEM((1, c3_p), jnp.float32)],
        compiler_params=pltpu.CompilerParams(
            dimension_semantics=("parallel", "arbitrary"),
            vmem_limit_bytes=_vmem_limit_bytes()),
        cost_estimate=pl.CostEstimate(
            flops=int(2 * B * Hw * pl_p * c3_p),
            transcendentals=int(B * (c3_p + 8)),
            bytes_accessed=int(B * Hw * pl_p * 2 + pl_p * c3_p * 2
                               + B * Hw * c3_p * 2)),
    )(out2, mask, w3, b3, fc1w, fc1b, w1c, b1c, w2c, b2a)


# -----------------------------------------------------------------------------
# Kernel C: channel gate * out3 + identity residual, final ReLU (tiled rows)
# -----------------------------------------------------------------------------
def gate_residual_relu_kernel(x_ref, res_ref, gate_ref, o_ref):
    o_ref[...] = jnp.maximum(
        x_ref[...].astype(jnp.float32) * gate_ref[...] + res_ref[...], 0.0)


def gate_residual_relu(out3, res, gate, *, thw):
    B, Hw, C = out3.shape
    n_hw = Hw // thw
    return pl.pallas_call(
        gate_residual_relu_kernel,
        out_shape=jax.ShapeDtypeStruct((B, Hw, C), jnp.float32),
        grid=(B, n_hw),
        in_specs=[
            pl.BlockSpec((None, thw, C), lambda b, j: (b, j, 0)),
            pl.BlockSpec((None, thw, C), lambda b, j: (b, j, 0)),
            pl.BlockSpec((None, 1, C), lambda b, j: (b, 0, 0)),
        ],
        out_specs=pl.BlockSpec((None, thw, C), lambda b, j: (b, j, 0)),
        compiler_params=pltpu.CompilerParams(
            dimension_semantics=("parallel", "parallel"),
            vmem_limit_bytes=_vmem_limit_bytes()),
    )(out3, res, gate)


# -----------------------------------------------------------------------------
# Parameters (deterministic, synthetic)
# -----------------------------------------------------------------------------
def make_params(key, inplanes, planes, n_datasets, reduction):
    c3 = planes * 4
    hid = max(c3 // reduction, 1)
    ks = jax.random.split(key, 12)

    def nrm(k, shape, scale):
        return scale * jax.random.normal(k, shape, jnp.float32)

    def bn(k, c, eps=1e-5):
        k1, k2, k3, k4 = jax.random.split(k, 4)
        gamma = 0.5 + jax.random.uniform(k1, (c,), jnp.float32)
        beta = 0.1 * jax.random.normal(k2, (c,), jnp.float32)
        mean = 0.1 * jax.random.normal(k3, (c,), jnp.float32)
        var = 0.5 + jax.random.uniform(k4, (c,), jnp.float32)
        scale = gamma / jnp.sqrt(var + eps)
        return scale, beta - mean * scale

    p = {}
    p['w1_oihw'] = nrm(ks[0], (planes, inplanes, 1, 1), 0.2)
    p['w2_oihw'] = nrm(ks[1], (planes, planes, 3, 3), 0.2)
    p['w3_oihw'] = nrm(ks[2], (c3, planes, 1, 1), 0.2)
    p['bn1_scale'], p['bn1_bias'] = bn(ks[3], planes)
    p['bn2_scale'], p['bn2_bias'] = bn(ks[4], planes)
    p['bn3_scale'], p['bn3_bias'] = bn(ks[5], c3)
    p['fc1_w'] = nrm(ks[6], (n_datasets, c3), 0.2)
    p['fc1_b'] = nrm(ks[7], (n_datasets,), 0.1)
    p['se_w1'] = nrm(ks[8], (n_datasets, hid, c3), 0.2)
    p['se_b1'] = nrm(ks[9], (n_datasets, hid), 0.1)
    p['se_w2'] = nrm(ks[10], (n_datasets, c3, hid), 0.2)
    p['se_b2'] = nrm(ks[11], (n_datasets, c3), 0.1)
    return p


# -----------------------------------------------------------------------------
# Forward pass (Pallas) — matches DABottleneck.forward, downsample=None
# -----------------------------------------------------------------------------
def da_bottleneck_forward(x_nchw, p, stride=1):
    assert stride == 1, "only the stride=1 / downsample=None config is implemented"
    B, Cin, H, W = x_nchw.shape
    planes = p['w1_oihw'].shape[0]
    c3 = p['w3_oihw'].shape[0]
    assert Cin == c3, "identity residual requires matching channel counts"

    cin_p = _round_up(Cin, LANE)
    pl_p = _round_up(planes, LANE)
    c3_p = _round_up(c3, LANE)
    Wr = _round_up(W + 2, 8)          # pitched row width: >= W+2 and 8-aligned
    Hw = H * Wr
    thw = _pick_row_tile(H, Wr, c3_p)

    # single pass over the input: NCHW -> pitched NHWC (width padded W->Wr,
    # channels padded to a lane multiple).  The f32 copy doubles as the
    # residual; the bf16 copy feeds conv1.  cin_p == c3_p because Cin == c3.
    x_nhwc = jnp.transpose(x_nchw, (0, 2, 3, 1)).astype(jnp.float32)
    x_pit = jnp.pad(x_nhwc, ((0, 0), (0, 0), (0, Wr - W), (0, cin_p - Cin)))
    res_pit = x_pit.reshape(B, Hw, c3_p)
    x_bf = x_pit.astype(jnp.bfloat16).reshape(B, Hw, cin_p)

    # validity mask of pitched rows (w < W), shared by conv1 gap zeroing and
    # the DomainAttention average pool.
    mask = (jnp.arange(Wr) < W).astype(jnp.float32)
    mask = jnp.tile(mask, H).reshape(Hw, 1)

    # BN scales folded into the conv weights (epilogues are just "+ bias").
    w1s = (p['w1_oihw'][:, :, 0, 0] * p['bn1_scale'][:, None]).T
    w1s = jnp.pad(w1s, ((0, cin_p - Cin), (0, pl_p - planes))).astype(jnp.bfloat16)
    b1 = jnp.pad(p['bn1_bias'], (0, pl_p - planes)).reshape(1, pl_p)

    w2s = p['w2_oihw'] * p['bn2_scale'][:, None, None, None]
    w2s = jnp.transpose(w2s, (2, 3, 1, 0))               # (ky, kx, Cin, Cout)
    w2s = jnp.pad(w2s, ((0, 0), (0, 0), (0, pl_p - planes), (0, pl_p - planes)))
    w2s = w2s.reshape(3, 3 * pl_p, pl_p).astype(jnp.bfloat16)
    b2 = jnp.pad(p['bn2_bias'], (0, pl_p - planes)).reshape(1, pl_p)

    w3s = (p['w3_oihw'][:, :, 0, 0] * p['bn3_scale'][:, None]).T
    w3s = jnp.pad(w3s, ((0, pl_p - planes), (0, c3_p - c3))).astype(jnp.bfloat16)
    b3 = jnp.pad(p['bn3_bias'], (0, c3_p - c3)).reshape(1, c3_p)

    # DomainAttention: fc_1 plus all SE adapters batched into two GEMMs.
    nA = p['se_w1'].shape[0]
    hid = p['se_w1'].shape[1]
    fc1w = jnp.pad(p['fc1_w'].T, ((0, c3_p - c3), (0, 0)))            # (C, nA)
    fc1b = p['fc1_b'].reshape(1, nA)
    w1c = jnp.pad(jnp.concatenate([p['se_w1'][i].T for i in range(nA)], axis=1),
                  ((0, c3_p - c3), (0, 0)))                            # (C, nA*hid)
    b1c = p['se_b1'].reshape(1, nA * hid)
    w2c = jnp.pad(jnp.concatenate([p['se_w2'][i].T for i in range(nA)], axis=0),
                  ((0, 0), (0, c3_p - c3)))                            # (nA*hid, C)
    b2a = jnp.pad(p['se_b2'], ((0, 0), (0, c3_p - c3)))                # (nA, C)

    # ---- kernel A: conv1 + bn1 + relu fused with conv2 + bn2 + relu ----
    out2 = conv1_conv2(x_bf, mask, w1s, b1, w2s, b2, H=H, Wr=Wr)

    # ---- kernel B: conv3 + bn3 fused with DomainAttention pool + gate ----
    out3, gate = conv3_da_gate(out2, mask, w3s, b3, fc1w, fc1b,
                               w1c, b1c, w2c, b2a, n_valid=H * W, thw=thw)

    # ---- kernel C: gate * out3 + identity residual, final ReLU ----
    out = gate_residual_relu(out3, res_pit, gate, thw=thw)
    out = out.reshape(B, H, Wr, c3_p)[:, :, :W, :c3]
    return jnp.transpose(out, (0, 3, 1, 2))               # back to NCHW


# -----------------------------------------------------------------------------
# Pure-JAX reference (same math & precision policy: bf16 convs with the BN
# scale pre-folded into the weights, f32 accumulation, bf16 conv3 storage)
# -----------------------------------------------------------------------------
def ref_forward(x, p, stride=1):
    f32, bf = jnp.float32, jnp.bfloat16

    def conv_bn(xx, w, scale, bias, s=1, pad=0, relu=True):
        wf = (w * scale[:, None, None, None]).astype(bf)
        out = jax.lax.conv_general_dilated(
            xx.astype(bf), wf, (s, s), [(pad, pad), (pad, pad)],
            dimension_numbers=('NCHW', 'OIHW', 'NCHW'),
            preferred_element_type=f32)
        out = out + bias[None, :, None, None]
        return jnp.maximum(out, 0.0) if relu else out

    out = conv_bn(x, p['w1_oihw'], p['bn1_scale'], p['bn1_bias'])
    out = conv_bn(out, p['w2_oihw'], p['bn2_scale'], p['bn2_bias'], stride, 1)
    out = conv_bn(out, p['w3_oihw'], p['bn3_scale'], p['bn3_bias'], relu=False)

    pooled = out.mean(axis=(2, 3))                 # f32 pool (as in PyTorch)
    out_bf = out.astype(bf).astype(f32)            # mirror bf16 storage of out3
    wts = jax.nn.softmax(pooled @ p['fc1_w'].T + p['fc1_b'], axis=1)
    gate_pre = jnp.zeros_like(pooled)
    for i in range(p['se_w1'].shape[0]):
        h = jnp.maximum(pooled @ p['se_w1'][i].T + p['se_b1'][i], 0.0)
        y = h @ p['se_w2'][i].T + p['se_b2'][i]
        gate_pre = gate_pre + y * wts[:, i:i + 1]
    gate = jax.nn.sigmoid(gate_pre)
    out = out_bf * gate[:, :, None, None] + x
    return jnp.maximum(out, 0.0)


if __name__ == "__main__":
    key = jax.random.PRNGKey(0)
    kx, kp = jax.random.split(key)

    B, inplanes, H, W = 2, 32, 8, 8
    planes = 8                        # expansion 4 -> out channels 32 == inplanes
    x = jax.random.normal(kx, (B, inplanes, H, W), jnp.float32)
    params = make_params(kp, inplanes, planes, N_DATASETS, REDUCTION)

    out = jax.block_until_ready(da_bottleneck_forward(x, params, stride=1))

    ref = ref_forward(x, params, stride=1)
    err = float(jnp.max(jnp.abs(out - ref)))
    assert out.shape == (B, planes * 4, H, W), out.shape
    assert err < 2e-2, f"max abs error {err}"
    print("KERNEL_OK")
</pallas_src>

<mosaic_0001>
module attributes {stable_mosaic.version = 11 : i64} {
  func.func @conv12_kernel(%arg0: i32, %arg1: memref<1x128x128xbf16, #tpu.memory_space<vmem>>, %arg2: memref<128x1xf32, #tpu.memory_space<vmem>>, %arg3: memref<128x128xbf16, #tpu.memory_space<vmem>>, %arg4: memref<1x128xf32, #tpu.memory_space<vmem>>, %arg5: memref<3x384x128xbf16, #tpu.memory_space<vmem>>, %arg6: memref<1x128xf32, #tpu.memory_space<vmem>>, %arg7: memref<1x128x128xbf16, #tpu.memory_space<vmem>>, %arg8: memref<176x128xbf16, #tpu.memory_space<vmem>>) attributes {dimension_semantics = [#tpu.dimension_semantics<parallel>], iteration_bounds = array<i64: 2>, scalar_prefetch = 0 : i64, scratch_operands = 1 : i64, tpu.core_type = #tpu.core_type<tc>, window_params = [{transform_indices = @transform_0, window_bounds = array<i64: 1, 128, 128>}, {pipeline_mode = #tpu.pipeline_mode<synchronous>, transform_indices = @transform_1, window_bounds = array<i64: 128, 1>}, {pipeline_mode = #tpu.pipeline_mode<synchronous>, transform_indices = @transform_2, window_bounds = array<i64: 128, 128>}, {pipeline_mode = #tpu.pipeline_mode<synchronous>, transform_indices = @transform_3, window_bounds = array<i64: 1, 128>}, {pipeline_mode = #tpu.pipeline_mode<synchronous>, transform_indices = @transform_4, window_bounds = array<i64: 3, 384, 128>}, {pipeline_mode = #tpu.pipeline_mode<synchronous>, transform_indices = @transform_5, window_bounds = array<i64: 1, 128>}, {transform_indices = @transform_6, window_bounds = array<i64: 1, 128, 128>}]} {
    %c0 = arith.constant 0 : index
    %c0_0 = arith.constant 0 : index
    %c0_1 = arith.constant 0 : index
    %0 = vector.load %arg1[%c0, %c0_0, %c0_1] : memref<1x128x128xbf16, #tpu.memory_space<vmem>>, vector<1x128x128xbf16>
    %1 = vector.shape_cast %0 : vector<1x128x128xbf16> to vector<128x128xbf16>
    %c0_2 = arith.constant 0 : index
    %c0_3 = arith.constant 0 : index
    %2 = vector.load %arg3[%c0_2, %c0_3] : memref<128x128xbf16, #tpu.memory_space<vmem>>, vector<128x128xbf16>
    %cst = arith.constant dense<0.000000e+00> : vector<128x128xf32>
    %3 = tpu.matmul %1, %2, %cst {dimension_numbers = #tpu.dot_dimension_numbers<[1], [0], [0], [1], [0, 0, 1, 1], [], []>} : vector<128x128xbf16>, vector<128x128xbf16>, vector<128x128xf32> -> vector<128x128xf32>
    %c0_4 = arith.constant 0 : index
    %c0_5 = arith.constant 0 : index
    %4 = vector.load %arg4[%c0_4, %c0_5] : memref<1x128xf32, #tpu.memory_space<vmem>>, vector<1x128xf32>
    %5 = vector.broadcast %4 : vector<1x128xf32> to vector<128x128xf32>
    %6 = arith.addf %3, %5 : vector<128x128xf32>
    %cst_6 = arith.constant 0.000000e+00 : f32
    %7 = vector.broadcast %cst_6 : f32 to vector<128x128xf32>
    %8 = arith.maximumf %6, %7 : vector<128x128xf32>
    %c0_7 = arith.constant 0 : index
    %c0_8 = arith.constant 0 : index
    %9 = vector.load %arg2[%c0_7, %c0_8] : memref<128x1xf32, #tpu.memory_space<vmem>>, vector<128x1xf32>
    %10 = vector.broadcast %9 : vector<128x1xf32> to vector<128x128xf32>
    %11 = arith.mulf %8, %10 : vector<128x128xf32>
    %cst_9 = arith.constant 0.000000e+00 : bf16
    %12 = vector.broadcast %cst_9 : bf16 to vector<176x128xbf16>
    %c0_10 = arith.constant 0 : index
    %c0_11 = arith.constant 0 : index
    %13 = vector.load %arg8[%c0_10, %c0_11] : memref<176x128xbf16, #tpu.memory_space<vmem>>, vector<176x128xbf16>
    tpu.vector_store %arg8[%c0_10, %c0_11], %12 {strides = array<i32>} : memref<176x128xbf16, #tpu.memory_space<vmem>>, vector<176x128xbf16>,
    %14 = arith.truncf %11 : vector<128x128xf32> to vector<128x128xbf16>
    %c24 = arith.constant 24 : index
    %c0_12 = arith.constant 0 : index
    %15 = vector.load %arg8[%c24, %c0_12] : memref<176x128xbf16, #tpu.memory_space<vmem>>, vector<128x128xbf16>
    tpu.vector_store %arg8[%c24, %c0_12], %14 {strides = array<i32>} : memref<176x128xbf16, #tpu.memory_space<vmem>>, vector<128x128xbf16>,
    %cst_13 = arith.constant 0.000000e+00 : f32
    %16 = vector.broadcast %cst_13 : f32 to vector<128x128xf32>
    %c7 = arith.constant 7 : index
    %c0_14 = arith.constant 0 : index
    %17 = vector.load %arg8[%c7, %c0_14] : memref<176x128xbf16, #tpu.memory_space<vmem>>, vector<128x128xbf16>
    %c8 = arith.constant 8 : index
    %c0_15 = arith.constant 0 : index
    %18 = vector.load %arg8[%c8, %c0_15] : memref<176x128xbf16, #tpu.memory_space<vmem>>, vector<128x128xbf16>
    %c9 = arith.constant 9 : index
    %c0_16 = arith.constant 0 : index
    %19 = vector.load %arg8[%c9, %c0_16] : memref<176x128xbf16, #tpu.memory_space<vmem>>, vector<128x128xbf16>
    %20 = tpu.concatenate %17, %18, %19 in 1 : vector<128x128xbf16>, vector<128x128xbf16>, vector<128x128xbf16> -> vector<128x384xbf16>
    %c0_17 = arith.constant 0 : index
    %c0_18 = arith.constant 0 : index
    %c0_19 = arith.constant 0 : index
    %21 = vector.load %arg5[%c0_17, %c0_18, %c0_19] : memref<3x384x128xbf16, #tpu.memory_space<vmem>>, vector<1x384x128xbf16>
    %22 = vector.shape_cast %21 : vector<1x384x128xbf16> to vector<384x128xbf16>
    %cst_20 = arith.constant dense<0.000000e+00> : vector<128x128xf32>
    %23 = tpu.matmul %20, %22, %cst_20 {dimension_numbers = #tpu.dot_dimension_numbers<[1], [0], [0], [1], [0, 0, 1, 1], [], []>} : vector<128x384xbf16>, vector<384x128xbf16>, vector<128x128xf32> -> vector<128x128xf32>
    %24 = arith.addf %16, %23 : vector<128x128xf32>
    %c23 = arith.constant 23 : index
    %c0_21 = arith.constant 0 : index
    %25 = vector.load %arg8[%c23, %c0_21] : memref<176x128xbf16, #tpu.memory_space<vmem>>, vector<128x128xbf16>
    %c24_22 = arith.constant 24 : index
    %c0_23 = arith.constant 0 : index
    %26 = vector.load %arg8[%c24_22, %c0_23] : memref<176x128xbf16, #tpu.memory_space<vmem>>, vector<128x128xbf16>
    %c25 = arith.constant 25 : index
    %c0_24 = arith.constant 0 : index
    %27 = vector.load %arg8[%c25, %c0_24] : memref<176x128xbf16, #tpu.memory_space<vmem>>, vector<128x128xbf16>
    %28 = tpu.concatenate %25, %26, %27 in 1 : vector<128x128xbf16>, vector<128x128xbf16>, vector<128x128xbf16> -> vector<128x384xbf16>
    %c1 = arith.constant 1 : index
    %c0_25 = arith.constant 0 : index
    %c0_26 = arith.constant 0 : index
    %29 = vector.load %arg5[%c1, %c0_25, %c0_26] : memref<3x384x128xbf16, #tpu.memory_space<vmem>>, vector<1x384x128xbf16>
    %30 = vector.shape_cast %29 : vector<1x384x128xbf16> to vector<384x128xbf16>
    %cst_27 = arith.constant dense<0.000000e+00> : vector<128x128xf32>
    %31 = tpu.matmul %28, %30, %cst_27 {dimension_numbers = #tpu.dot_dimension_numbers<[1], [0], [0], [1], [0, 0, 1, 1], [], []>} : vector<128x384xbf16>, vector<384x128xbf16>, vector<128x128xf32> -> vector<128x128xf32>
    %32 = arith.addf %24, %31 : vector<128x128xf32>
    %c39 = arith.constant 39 : index
    %c0_28 = arith.constant 0 : index
    %33 = vector.load %arg8[%c39, %c0_28] : memref<176x128xbf16, #tpu.memory_space<vmem>>, vector<128x128xbf16>
    %c40 = arith.constant 40 : index
    %c0_29 = arith.constant 0 : index
    %34 = vector.load %arg8[%c40, %c0_29] : memref<176x128xbf16, #tpu.memory_space<vmem>>, vector<128x128xbf16>
    %c41 = arith.constant 41 : index
    %c0_30 = arith.constant 0 : index
    %35 = vector.load %arg8[%c41, %c0_30] : memref<176x128xbf16, #tpu.memory_space<vmem>>, vector<128x128xbf16>
    %36 = tpu.concatenate %33, %34, %35 in 1 : vector<128x128xbf16>, vector<128x128xbf16>, vector<128x128xbf16> -> vector<128x384xbf16>
    %c2 = arith.constant 2 : index
    %c0_31 = arith.constant 0 : index
    %c0_32 = arith.constant 0 : index
    %37 = vector.load %arg5[%c2, %c0_31, %c0_32] : memref<3x384x128xbf16, #tpu.memory_space<vmem>>, vector<1x384x128xbf16>
    %38 = vector.shape_cast %37 : vector<1x384x128xbf16> to vector<384x128xbf16>
    %cst_33 = arith.constant dense<0.000000e+00> : vector<128x128xf32>
    %39 = tpu.matmul %36, %38, %cst_33 {dimension_numbers = #tpu.dot_dimension_numbers<[1], [0], [0], [1], [0, 0, 1, 1], [], []>} : vector<128x384xbf16>, vector<384x128xbf16>, vector<128x128xf32> -> vector<128x128xf32>
    %40 = arith.addf %32, %39 : vector<128x128xf32>
    %c0_34 = arith.constant 0 : index
    %c0_35 = arith.constant 0 : index
    %41 = vector.load %arg6[%c0_34, %c0_35] : memref<1x128xf32, #tpu.memory_space<vmem>>, vector<1x128xf32>
    %42 = vector.broadcast %41 : vector<1x128xf32> to vector<128x128xf32>
    %43 = arith.addf %40, %42 : vector<128x128xf32>
    %cst_36 = arith.constant 0.000000e+00 : f32
    %44 = vector.broadcast %cst_36 : f32 to vector<128x128xf32>
    %45 = arith.maximumf %43, %44 : vector<128x128xf32>
    %46 = arith.truncf %45 : vector<128x128xf32> to vector<128x128xbf16>
    %c0_37 = arith.constant 0 : index
    %c0_38 = arith.constant 0 : index
    %c0_39 = arith.constant 0 : index
    %47 = vector.load %arg7[%c0_37, %c0_38, %c0_39] : memref<1x128x128xbf16, #tpu.memory_space<vmem>>, vector<1x128x128xbf16>
    %48 = vector.shape_cast %47 : vector<1x128x128xbf16> to vector<128x128xbf16>
    %49 = vector.shape_cast %46 : vector<128x128xbf16> to vector<1x128x128xbf16>
    tpu.vector_store %arg7[%c0_37, %c0_38, %c0_39], %49 {strides = array<i32>} : memref<1x128x128xbf16, #tpu.memory_space<vmem>>, vector<1x128x128xbf16>,
    return
  }
  func.func @transform_0(%arg0: i32) -> (i32, i32, i32) {
    %c0_i32 = arith.constant 0 : i32
    %c0_i32_0 = arith.constant 0 : i32
    %c0_i32_1 = arith.constant 0 : i32
    return %arg0, %c0_i32, %c0_i32_0 : i32, i32, i32
  }
  func.func @transform_1(%arg0: i32) -> (i32, i32) {
    %c0_i32 = arith.constant 0 : i32
    %c0_i32_0 = arith.constant 0 : i32
    %c0_i32_1 = arith.constant 0 : i32
    return %c0_i32, %c0_i32_0 : i32, i32
  }
  func.func @transform_2(%arg0: i32) -> (i32, i32) {
    %c0_i32 = arith.constant 0 : i32
    %c0_i32_0 = arith.constant 0 : i32
    %c0_i32_1 = arith.constant 0 : i32
    return %c0_i32, %c0_i32_0 : i32, i32
  }
  func.func @transform_3(%arg0: i32) -> (i32, i32) {
    %c0_i32 = arith.constant 0 : i32
    %c0_i32_0 = arith.constant 0 : i32
    %c0_i32_1 = arith.constant 0 : i32
    return %c0_i32, %c0_i32_0 : i32, i32
  }
  func.func @transform_4(%arg0: i32) -> (i32, i32, i32) {
    %c0_i32 = arith.constant 0 : i32
    %c0_i32_0 = arith.constant 0 : i32
    %c0_i32_1 = arith.constant 0 : i32
    %c0_i32_2 = arith.constant 0 : i32
    return %c0_i32, %c0_i32_0, %c0_i32_1 : i32, i32, i32
  }
  func.func @transform_5(%arg0: i32) -> (i32, i32) {
    %c0_i32 = arith.constant 0 : i32
    %c0_i32_0 = arith.constant 0 : i32
    %c0_i32_1 = arith.constant 0 : i32
    return %c0_i32, %c0_i32_0 : i32, i32
  }
  func.func @transform_6(%arg0: i32) -> (i32, i32, i32) {
    %c0_i32 = arith.constant 0 : i32
    %c0_i32_0 = arith.constant 0 : i32
    %c0_i32_1 = arith.constant 0 : i32
    return %arg0, %c0_i32, %c0_i32_0 : i32, i32, i32
  }
}

</mosaic_0001>

<llo_original>
// kernel: tpu_custom_call.1
$region0: #{tpu_custom_call.1}
  #allocation0 [shape = 'u32[]', space=smem, size = 0x4, offset = 0x4, fixed_abs, tag = 'smem constant byte address 0x4 - core index']
  #allocation1 [shape = 'u32[144,128]{1,0:T(1,128)}', space=vmem, size = 0x12000, scoped, tag = 'internal scratch']
  #allocation2 [shape = 'bf16[176,128]{1,0:T(8,128)(2,1)}', space=vmem, size = 0xb000, scoped, tag = 'scratch operand']
  %s0 = inlined_call_operand.vmem [shape: bf16[2,128,128], index: 0, kind: input, shape index: {}]
  %s1 = inlined_call_operand.vmem [shape: f32[128,1], index: 1, kind: input, shape index: {}]
  %s2 = inlined_call_operand.hbm [shape: bf16[128,128], index: 2, kind: input, shape index: {}]
  %s3 = inlined_call_operand.vmem [shape: f32[1,128], index: 3, kind: input, shape index: {}]
  %s4 = inlined_call_operand.hbm [shape: bf16[3,384,128], index: 4, kind: input, shape index: {}]
  %s5 = inlined_call_operand.vmem [shape: f32[1,128], index: 5, kind: input, shape index: {}]
  %s6 = inlined_call_operand.hbm [shape: bf16[2,128,128], index: 6, kind: output, shape index: {}]
  %s7 = sld [smem:[#allocation0]]
  $region65: #{tpu_custom_call.1} parent=0
    _
  %s9 = ssub.s32 1, %s7
  %s10 = scalar_select 0, %s9, %s7
  $region1: #{tpu_custom_call.1} parent=0
    #allocation3 [shape = 'u8[32768]{0}', space=vmem, size = 0x8000, scoped, tag = 'input window, operand 2, single buffered']
    #allocation4 [shape = 's32[2]{0}', space=sflag, size = 0x8, scoped, tag = 'scoped memory for tpu_custom_call.1']
    #allocation5 [shape = 's32[2]{0}', space=sflag, size = 0x8, scoped, tag = 'scoped memory for tpu_custom_call.1']
    #allocation6 [shape = 'u8[294912]{0}', space=vmem, size = 0x48000, scoped, tag = 'input window, operand 4, single buffered']
    #allocation7 [shape = 's32[1]{0}', space=sflag, size = 0x4, scoped, tag = 'scoped memory for tpu_custom_call.1']
    #allocation8 [shape = 'u8[65536]{0}', space=vmem, size = 0x10000, scoped, tag = 'output window, operand 0']
    %11 = vsyncpa [#allocation4], 0
    %12 = vsyncpa [#allocation7], 0
    %13 = vsyncpa [#allocation5], 0
    %s14 = scalar_lea.sflag [#allocation5], 1
    %15 = vsyncpa %s14, 0
    loop: start=0, step=1, limit=4
    $region2: #{tpu_custom_call.1} parent=1 // loop_pre_header
      _
    $region3: #{tpu_custom_call.1} parent=1 // loop_header
      %s17 = sphi 0, %s21
      %p18 = scmp.ge.s32.totalorder %s17, 4
      %s27 = sphi 0, %s29
      %s30 = sphi 0, %s27
      %s31 = sphi 0, %s30
      %s47 = sphi 0, %s31
      %s51 = sphi 0, %s51
      %s53 = sphi 0, %s51
      %s54 = sphi 0, %s53
      %s68 = sphi 0, %s54
      %s72 = sphi 0, %s72
      %s74 = sphi 0, %s72
      %s75 = sphi 0, %s74
      %s89 = sphi 0, %s75
      %s93 = sphi 0, %s93
      %s95 = sphi 0, %s93
      %s96 = sphi 0, %s95
      %s110 = sphi 0, %s96
      %s114 = sphi 0, %s114
      %s116 = sphi 0, %s114
      %s117 = sphi 0, %s116
      %s131 = sphi 0, %s117
      %s135 = sphi 0, %s135
      %s137 = sphi 0, %s135
      %s138 = sphi 0, %s137
      %s152 = sphi 0, %s138
      %s158 = sphi 0, %s160
      %s161 = sphi 0, %s158
      %s162 = sphi 0, %s161
      %s178 = sphi 0, %s162
    $region4: #{tpu_custom_call.1} parent=1 // loop_header_branch
      %20 = sbr.rel (%p18) target = $region8
    $region5: #{tpu_custom_call.1} parent=1 // loop_body
      %s22 = ssub.s32 %s17, 1
      %s23 = ssub.s32 %s17, 2
      %s24 = sadd.s32 %s17, 1
      %s25 = ssub.s32 %s17, %s24
      %p26 = scmp.eq.s32.totalorder %s25, 0
      %s28 = sadd.s32 %s27, 1
      %s29 = scalar_select %p26, %s27, %s28
      %p32 = pneg %p26
      %p33 = scmp.eq.s32.totalorder %s17, 1
      %p34 = por %p32, %p33
      %p35 = scmp.ne.s32.totalorder %s27, %s30
      %p36 = scmp.eq.s32.totalorder %s17, 0
      %p37 = por %p35, %p36
      %p38 = scmp.ne.s32.totalorder %s27, %s30
      %p39 = scmp.eq.s32.totalorder %s22, 1
      %p40 = por %p38, %p39
      %p41 = scmp.ne.s32.totalorder %s30, %s31
      %p42 = scmp.eq.s32.totalorder %s22, 0
      %p43 = por %p41, %p42
      %p44 = scmp.ne.s32.totalorder %s30, %s31
      %p45 = scmp.eq.s32.totalorder %s23, 1
      %p46 = por %p44, %p45
      %p48 = scmp.ne.s32.totalorder %s31, %s47
      %p49 = scmp.eq.s32.totalorder %s23, 0
      %p50 = por %p48, %p49
      %s52 = sadd.s32 %s51, 1
      %p55 = scmp.eq.s32.totalorder %s17, 1
      %p56 = scmp.ne.s32.totalorder %s51, %s53
      %p57 = scmp.eq.s32.totalorder %s17, 0
      %p58 = por %p56, %p57
      %p59 = scmp.ne.s32.totalorder %s51, %s53
      %p60 = scmp.eq.s32.totalorder %s22, 1
      %p61 = por %p59, %p60
      %p62 = scmp.ne.s32.totalorder %s53, %s54
      %p63 = scmp.eq.s32.totalorder %s22, 0
      %p64 = por %p62, %p63
      %p65 = scmp.ne.s32.totalorder %s53, %s54
      %p66 = scmp.eq.s32.totalorder %s23, 1
      %p67 = por %p65, %p66
      %p69 = scmp.ne.s32.totalorder %s54, %s68
      %p70 = scmp.eq.s32.totalorder %s23, 0
      %p71 = por %p69, %p70
      %s73 = sadd.s32 %s72, 1
      %p76 = scmp.eq.s32.totalorder %s17, 1
      %p77 = scmp.ne.s32.totalorder %s72, %s74
      %p78 = scmp.eq.s32.totalorder %s17, 0
      %p79 = por %p77, %p78
      %p80 = scmp.ne.s32.totalorder %s72, %s74
      %p81 = scmp.eq.s32.totalorder %s22, 1
      %p82 = por %p80, %p81
      %p83 = scmp.ne.s32.totalorder %s74, %s75
      %p84 = scmp.eq.s32.totalorder %s22, 0
      %p85 = por %p83, %p84
      %p86 = scmp.ne.s32.totalorder %s74, %s75
      %p87 = scmp.eq.s32.totalorder %s23, 1
      %p88 = por %p86, %p87
      %p90 = scmp.ne.s32.totalorder %s75, %s89
      %p91 = scmp.eq.s32.totalorder %s23, 0
      %p92 = por %p90, %p91
      %s94 = sadd.s32 %s93, 1
      %p97 = scmp.eq.s32.totalorder %s17, 1
      %p98 = scmp.ne.s32.totalorder %s93, %s95
      %p99 = scmp.eq.s32.totalorder %s17, 0
      %p100 = por %p98, %p99
      %p101 = scmp.ne.s32.totalorder %s93, %s95
      %p102 = scmp.eq.s32.totalorder %s22, 1
      %p103 = por %p101, %p102
      %p104 = scmp.ne.s32.totalorder %s95, %s96
      %p105 = scmp.eq.s32.totalorder %s22, 0
      %p106 = por %p104, %p105
      %p107 = scmp.ne.s32.totalorder %s95, %s96
      %p108 = scmp.eq.s32.totalorder %s23, 1
      %p109 = por %p107, %p108
      %p111 = scmp.ne.s32.totalorder %s96, %s110
      %p112 = scmp.eq.s32.totalorder %s23, 0
      %p113 = por %p111, %p112
      %s115 = sadd.s32 %s114, 1
      %p118 = scmp.eq.s32.totalorder %s17, 1
      %p119 = scmp.ne.s32.totalorder %s114, %s116
      %p120 = scmp.eq.s32.totalorder %s17, 0
      %p121 = por %p119, %p120
      %p122 = scmp.ne.s32.totalorder %s114, %s116
      %p123 = scmp.eq.s32.totalorder %s22, 1
      %p124 = por %p122, %p123
      %p125 = scmp.ne.s32.totalorder %s116, %s117
      %p126 = scmp.eq.s32.totalorder %s22, 0
      %p127 = por %p125, %p126
      %p128 = scmp.ne.s32.totalorder %s116, %s117
      %p129 = scmp.eq.s32.totalorder %s23, 1
      %p130 = por %p128, %p129
      %p132 = scmp.ne.s32.totalorder %s117, %s131
      %p133 = scmp.eq.s32.totalorder %s23, 0
      %p134 = por %p132, %p133
      %s136 = sadd.s32 %s135, 1
      %p139 = scmp.eq.s32.totalorder %s17, 1
      %p140 = scmp.ne.s32.totalorder %s135, %s137
      %p141 = scmp.eq.s32.totalorder %s17, 0
      %p142 = por %p140, %p141
      %p143 = scmp.ne.s32.totalorder %s135, %s137
      %p144 = scmp.eq.s32.totalorder %s22, 1
      %p145 = por %p143, %p144
      %p146 = scmp.ne.s32.totalorder %s137, %s138
      %p147 = scmp.eq.s32.totalorder %s22, 0
      %p148 = por %p146, %p147
      %p149 = scmp.ne.s32.totalorder %s137, %s138
      %p150 = scmp.eq.s32.totalorder %s23, 1
      %p151 = por %p149, %p150
      %p153 = scmp.ne.s32.totalorder %s138, %s152
      %p154 = scmp.eq.s32.totalorder %s23, 0
      %p155 = por %p153, %p154
      %s156 = ssub.s32 %s17, %s24
      %p157 = scmp.eq.s32.totalorder %s156, 0
      %s159 = sadd.s32 %s158, 1
      %s160 = scalar_select %p157, %s158, %s159
      %p163 = pneg %p157
      %p164 = scmp.eq.s32.totalorder %s17, 1
      %p165 = por %p163, %p164
      %p166 = scmp.ne.s32.totalorder %s158, %s161
      %p167 = scmp.eq.s32.totalorder %s17, 0
      %p168 = por %p166, %p167
      %p169 = scmp.ne.s32.totalorder %s158, %s161
      %p170 = scmp.eq.s32.totalorder %s22, 1
      %p171 = por %p169, %p170
      %p172 = scmp.ne.s32.totalorder %s161, %s162
      %p173 = scmp.eq.s32.totalorder %s22, 0
      %p174 = por %p172, %p173
      %p175 = scmp.ne.s32.totalorder %s161, %s162
      %p176 = scmp.eq.s32.totalorder %s23, 1
      %p177 = por %p175, %p176
      %p179 = scmp.ne.s32.totalorder %s162, %s178
      %p180 = scmp.eq.s32.totalorder %s23, 0
      %p181 = por %p179, %p180
      %p182 = scmp.le.s32.totalorder 1, %s17
      %p183 = scmp.lt.s32.totalorder %s17, 3
      %p184 = pnand %p182, %p183
      %p185 = pneg %p184
      // Predicated region
      $region9: #{tpu_custom_call.1} parent=5 // pred_check
        _
      $region10: #{tpu_custom_call.1} parent=5 // pred_check_branch
        %187 = sbr.rel (%p184) target = $region12
      $region11: #{tpu_custom_call.1} parent=5 // pred_region
        %s188 = ssub.s32 %s17, 1
        // Predicated region
        $region13: #{tpu_custom_call.1} parent=11 // pred_check
          %p189 = pneg %p64
        $region14: #{tpu_custom_call.1} parent=11 // pred_check_branch
          %191 = sbr.rel (%p189) target = $region16
        $region15: #{tpu_custom_call.1} parent=11 // pred_region
          _
        $region16: #{tpu_custom_call.1} parent=11 // pred_fallthru
          _
        // Predicated region
        $region17: #{tpu_custom_call.1} parent=11 // pred_check
          %p192 = pneg %p85
        $region18: #{tpu_custom_call.1} parent=11 // pred_check_branch
          %194 = sbr.rel (%p192) target = $region20
        $region19: #{tpu_custom_call.1} parent=11 // pred_region
          %s196 = ssub.s32 1024, 1024
          %197 = vsyncadd [#allocation4], %s196
          %s198 = sshll.u32 [#allocation3], 4
          %s199 = int_to_ptr.vmem [resolvable:$true] %s198
          %204 = dma.hbm_to_vmem [thread:$0]  %s2, 1024, %s199, [#allocation4], 64, 64, 4
        $region20: #{tpu_custom_call.1} parent=11 // pred_fallthru
          _
        // Predicated region
        $region21: #{tpu_custom_call.1} parent=11 // pred_check
          %p205 = pneg %p106
        $region22: #{tpu_custom_call.1} parent=11 // pred_check_branch
          %207 = sbr.rel (%p205) target = $region24
        $region23: #{tpu_custom_call.1} parent=11 // pred_region
          _
        $region24: #{tpu_custom_call.1} parent=11 // pred_fallthru
          _
        // Predicated region
        $region25: #{tpu_custom_call.1} parent=11 // pred_check
          %p208 = pneg %p127
        $region26: #{tpu_custom_call.1} parent=11 // pred_check_branch
          %210 = sbr.rel (%p208) target = $region28
        $region27: #{tpu_custom_call.1} parent=11 // pred_region
          %s212 = ssub.s32 9216, 9216
          %213 = vsyncadd [#allocation7], %s212
          %s214 = sshll.u32 [#allocation6], 4
          %s215 = int_to_ptr.vmem [resolvable:$true] %s214
          %220 = dma.hbm_to_vmem [thread:$0]  %s4, 9216, %s215, [#allocation7], 64, 64, 4
        $region28: #{tpu_custom_call.1} parent=11 // pred_fallthru
          _
        // Predicated region
        $region29: #{tpu_custom_call.1} parent=11 // pred_check
          %p221 = pneg %p148
        $region30: #{tpu_custom_call.1} parent=11 // pred_check_branch
          %223 = sbr.rel (%p221) target = $region32
        $region31: #{tpu_custom_call.1} parent=11 // pred_region
          _
        $region32: #{tpu_custom_call.1} parent=11 // pred_fallthru
          _
      $region12: #{tpu_custom_call.1} parent=5 // pred_fallthru
        _
      %p224 = scmp.lt.s32.totalorder %s17, 2
      // Predicated region
      $region33: #{tpu_custom_call.1} parent=5 // pred_check
        %p225 = pneg %p224
      $region34: #{tpu_custom_call.1} parent=5 // pred_check_branch
        %227 = sbr.rel (%p225) target = $region36
      $region35: #{tpu_custom_call.1} parent=5 // pred_region
        // Predicated region
        $region37: #{tpu_custom_call.1} parent=35 // pred_check
          %p228 = pneg %p37
        $region38: #{tpu_custom_call.1} parent=35 // pred_check_branch
          %230 = sbr.rel (%p228) target = $region40
        $region39: #{tpu_custom_call.1} parent=35 // pred_region
          %p231 = scmp.lt.s32.totalorder %s17, 1
          %s232 = scalar_select %p231, %s17, 1
          %s233 = smul.addr %s232, 16
          %s234 = smul.addr %s233, 4
          %s235 = scalar_lea.vmem %s0, %s234
        $region40: #{tpu_custom_call.1} parent=35 // pred_fallthru
          _
      $region36: #{tpu_custom_call.1} parent=5 // pred_fallthru
        _
      %p236 = scmp.le.s32.totalorder 1, %s17
      %p237 = scmp.lt.s32.totalorder %s17, 3
      %p238 = pnand %p236, %p237
      %p239 = pneg %p238
      // Predicated region
      $region41: #{tpu_custom_call.1} parent=5 // pred_check
        _
      $region42: #{tpu_custom_call.1} parent=5 // pred_check_branch
        %241 = sbr.rel (%p238) target = $region44
      $region43: #{tpu_custom_call.1} parent=5 // pred_region
        %s242 = ssub.s32 %s17, 1
        // Predicated region
        $region45: #{tpu_custom_call.1} parent=43 // pred_check
          %p243 = pneg %p85
        $region46: #{tpu_custom_call.1} parent=43 // pred_check_branch
          %245 = sbr.rel (%p243) target = $region48
        $region47: #{tpu_custom_call.1} parent=43 // pred_region
          %246 = dma.done [#allocation4], 1024
        $region48: #{tpu_custom_call.1} parent=43 // pred_fallthru
          _
        // Predicated region
        $region49: #{tpu_custom_call.1} parent=43 // pred_check
          %p247 = pneg %p127
        $region50: #{tpu_custom_call.1} parent=43 // pred_check_branch
          %249 = sbr.rel (%p247) target = $region52
        $region51: #{tpu_custom_call.1} parent=43 // pred_region
          %250 = dma.done [#allocation7], 9216
        $region52: #{tpu_custom_call.1} parent=43 // pred_fallthru
          _
        %p251 = scmp.lt.s32.totalorder %s22, 1
        %s252 = scalar_select %p251, %s22, 1
        %s253 = smul.addr %s252, 16
        %s254 = smul.addr %s253, 4
        %s255 = scalar_lea.vmem %s0, %s254
        %p256 = pneg %p43
        %p257 = pneg %p40
        %p258 = pneg %p64
        %p259 = pneg %p61
        %p260 = pneg %p85
        %p261 = pneg %p82
        %p262 = pneg %p106
        %p263 = pneg %p103
        %p264 = pneg %p127
        %p265 = pneg %p124
        %p266 = pneg %p148
        %p267 = pneg %p145
        %p268 = pneg %p174
        %p269 = pneg %p171
        %s270 = sand.u32 %s161, 1
        %s271 = scalar_lea.sflag [#allocation5], %s270
        %s272 = sand.u32 %s161, 1
        %s273 = smul.addr %s272, 64
        %s274 = scalar_lea.vmem [#allocation8], %s273
        %p275 = scmp.lt.s32.totalorder %s22, 1
        %s276 = scalar_select %p275, %s22, 1
        %s277 = smul.addr %s276, 16
        %s278 = smul.addr %s277, 4
        %s279 = scalar_lea.vmem %s0, %s278
        %v281 = vld [vmem:[%s279] sm:$0xf]
        %v282 = vld [vmem:[%s279 + $0x4] sm:$0xf]
        %v283 = vld [vmem:[%s279 + $0x8] sm:$0xf]
        %v284 = vld [vmem:[%s279 + $0xc] sm:$0xf]
        %v285 = vld [vmem:[%s279 + $0x10] sm:$0xf]
        %v286 = vld [vmem:[%s279 + $0x14] sm:$0xf]
        %v287 = vld [vmem:[%s279 + $0x18] sm:$0xf]
        %v288 = vld [vmem:[%s279 + $0x1c] sm:$0xf]
        %v289 = vld [vmem:[%s279 + $0x20] sm:$0xf]
        %v290 = vld [vmem:[%s279 + $0x24] sm:$0xf]
        %v291 = vld [vmem:[%s279 + $0x28] sm:$0xf]
        %v292 = vld [vmem:[%s279 + $0x2c] sm:$0xf]
        %v293 = vld [vmem:[%s279 + $0x30] sm:$0xf]
        %v294 = vld [vmem:[%s279 + $0x34] sm:$0xf]
        %v295 = vld [vmem:[%s279 + $0x38] sm:$0xf]
        %v296 = vld [vmem:[%s279 + $0x3c] sm:$0xf]
        %v297 = vld [vmem:[#allocation3] sm:$0xf]
        %v298 = vld [vmem:[#allocation3 + $0x4] sm:$0xf]
        %v299 = vld [vmem:[#allocation3 + $0x8] sm:$0xf]
        %v300 = vld [vmem:[#allocation3 + $0xc] sm:$0xf]
        %v301 = vld [vmem:[#allocation3 + $0x10] sm:$0xf]
        %v302 = vld [vmem:[#allocation3 + $0x14] sm:$0xf]
        %v303 = vld [vmem:[#allocation3 + $0x18] sm:$0xf]
        %v304 = vld [vmem:[#allocation3 + $0x1c] sm:$0xf]
        %v305 = vld [vmem:[#allocation3 + $0x20] sm:$0xf]
        %v306 = vld [vmem:[#allocation3 + $0x24] sm:$0xf]
        %v307 = vld [vmem:[#allocation3 + $0x28] sm:$0xf]
        %v308 = vld [vmem:[#allocation3 + $0x2c] sm:$0xf]
        %v309 = vld [vmem:[#allocation3 + $0x30] sm:$0xf]
        %v310 = vld [vmem:[#allocation3 + $0x34] sm:$0xf]
        %v311 = vld [vmem:[#allocation3 + $0x38] sm:$0xf]
        %v312 = vld [vmem:[#allocation3 + $0x3c] sm:$0xf]
        %v313 = vld [vmem:[%s3] sm:$0x1]
        %v315 = vlaneseq
        %v316 = vshrl.u32 %v315, 7
        %v317 = vsub.s32 0, %v316
        %v318 = vrot.slane %v313, %v317
        %v336 = vunpack.c.l.b16 %v281
        %v337 = vunpack.c.l.b16 %v282
        %v338 = vunpack.c.l.b16 %v283
        %v339 = vunpack.c.l.b16 %v284
        %v340 = vunpack.c.l.b16 %v285
        %v341 = vunpack.c.l.b16 %v286
        %v342 = vunpack.c.l.b16 %v287
        %v343 = vunpack.c.l.b16 %v288
        %v344 = vunpack.c.l.b16 %v289
        %v345 = vunpack.c.l.b16 %v290
        %v346 = vunpack.c.l.b16 %v291
        %v347 = vunpack.c.l.b16 %v292
        %v348 = vunpack.c.l.b16 %v293
        %v349 = vunpack.c.l.b16 %v294
        %v350 = vunpack.c.l.b16 %v295
        %v351 = vunpack.c.l.b16 %v296
        %v352 = vpack.c.b16 %v337, %v336
        %v353 = vpack.c.b16 %v339, %v338
        %v354 = vpack.c.b16 %v341, %v340
        %v355 = vpack.c.b16 %v343, %v342
        %v356 = vpack.c.b16 %v345, %v344
        %v357 = vpack.c.b16 %v347, %v346
        %v358 = vpack.c.b16 %v349, %v348
        %v359 = vpack.c.b16 %v351, %v350
        %v384 = vunpack.c.l.b16 %v297
        %v385 = vunpack.c.l.b16 %v298
        %v386 = vunpack.c.l.b16 %v299
        %v387 = vunpack.c.l.b16 %v300
        %v388 = vunpack.c.l.b16 %v301
        %v389 = vunpack.c.l.b16 %v302
        %v390 = vunpack.c.l.b16 %v303
        %v391 = vunpack.c.l.b16 %v304
        %v392 = vunpack.c.l.b16 %v305
        %v393 = vunpack.c.l.b16 %v306
        %v394 = vunpack.c.l.b16 %v307
        %v395 = vunpack.c.l.b16 %v308
        %v396 = vunpack.c.l.b16 %v309
        %v397 = vunpack.c.l.b16 %v310
        %v398 = vunpack.c.l.b16 %v311
        %v399 = vunpack.c.l.b16 %v312
        %v400 = vpack.c.b16 %v385, %v384
        %v401 = vpack.c.b16 %v387, %v386
        %v402 = vpack.c.b16 %v389, %v388
        %v403 = vpack.c.b16 %v391, %v390
        %v404 = vpack.c.b16 %v393, %v392
        %v405 = vpack.c.b16 %v395, %v394
        %v406 = vpack.c.b16 %v397, %v396
        %v407 = vpack.c.b16 %v399, %v398
        %416 = vmatprep.subr.bf16.mxu0 0
        %417 = vmatpush1.bf16.msra.mxu0 %v407
        %418 = vmatprep.subr.bf16.mxu0 0
        %419 = vmatpush1.bf16.msra.mxu0 %v406
        %420 = vmatprep.subr.bf16.mxu0 0
        %421 = vmatpush1.bf16.msra.mxu0 %v405
        %422 = vmatprep.subr.bf16.mxu0 0
        %423 = vmatpush1.bf16.msra.mxu0 %v404
        %424 = vmatprep.subr.bf16.mxu0 0
        %425 = vmatpush1.bf16.msra.mxu0 %v403
        %426 = vmatprep.subr.bf16.mxu0 0
        %427 = vmatpush1.bf16.msra.mxu0 %v402
        %428 = vmatprep.subr.bf16.mxu0 0
        %429 = vmatpush1.bf16.msra.mxu0 %v401
        %430 = vmatprep.subr.bf16.mxu0 0
        %431 = vmatpush1.bf16.msra.mxu0 %v400
        %432 = vmatprep.subr.bf16.mxu0 0
        %433 = vmatpush2.bf16.msra.mxu0 0
        %434 = vmatprep.subr.bf16.mxu0 0
        %435 = vmatpush2.bf16.msra.mxu0 0
        %436 = vmatprep.subr.bf16.mxu0 0
        %437 = vmatpush2.bf16.msra.mxu0 0
        %438 = vmatprep.subr.bf16.mxu0 0
        %439 = vmatpush2.bf16.msra.mxu0 0
        %440 = vmatprep.subr.bf16.mxu0 0
        %441 = vmatpush2.bf16.msra.mxu0 0
        %442 = vmatprep.subr.bf16.mxu0 0
        %443 = vmatpush2.bf16.msra.mxu0 0
        %444 = vmatprep.subr.bf16.mxu0 0
        %445 = vmatpush2.bf16.msra.mxu0 0
        %446 = vmatprep.subr.bf16.mxu0 0
        %447 = vmatpush2.bf16.msra.mxu0 0
        %448 = vmatprep.mubr.bf16.mxu0 0
        %449 = vmatmul.mubr.bf16.gmra.mxu0 %v352
        %v450 = vpop.f32.mrf.mxu0
        %v451 = vadd.f32 %v318, %v450
        %v452 = vpop.f32.mrf.mxu0
        %v453 = vpop.f32.mrf.mxu0
        %v454 = vadd.f32 %v318, %v453
        %v455 = vpop.f32.mrf.mxu0
        %456 = vmatprep.mubr.bf16.mxu0 0
        %457 = vmatmul.mubr.bf16.gmra.mxu0 %v353
        %v458 = vpop.f32.mrf.mxu0
        %v459 = vadd.f32 %v318, %v458
        %v460 = vpop.f32.mrf.mxu0
        %v461 = vpop.f32.mrf.mxu0
        %v462 = vadd.f32 %v318, %v461
        %v463 = vpop.f32.mrf.mxu0
        %464 = vmatprep.mubr.bf16.mxu0 0
        %465 = vmatmul.mubr.bf16.gmra.mxu0 %v354
        %v466 = vpop.f32.mrf.mxu0
        %v467 = vadd.f32 %v318, %v466
        %v468 = vpop.f32.mrf.mxu0
        %v469 = vpop.f32.mrf.mxu0
        %v470 = vadd.f32 %v318, %v469
        %v471 = vpop.f32.mrf.mxu0
        %472 = vmatprep.mubr.bf16.mxu0 0
        %473 = vmatmul.mubr.bf16.gmra.mxu0 %v355
        %v474 = vpop.f32.mrf.mxu0
        %v475 = vadd.f32 %v318, %v474
        %v476 = vpop.f32.mrf.mxu0
        %v477 = vpop.f32.mrf.mxu0
        %v478 = vadd.f32 %v318, %v477
        %v479 = vpop.f32.mrf.mxu0
        %480 = vmatprep.mubr.bf16.mxu0 0
        %481 = vmatmul.mubr.bf16.gmra.mxu0 %v356
        %v482 = vpop.f32.mrf.mxu0
        %v483 = vadd.f32 %v318, %v482
        %v484 = vpop.f32.mrf.mxu0
        %v485 = vpop.f32.mrf.mxu0
        %v486 = vadd.f32 %v318, %v485
        %v487 = vpop.f32.mrf.mxu0
        %488 = vmatprep.mubr.bf16.mxu0 0
        %489 = vmatmul.mubr.bf16.gmra.mxu0 %v357
        %v490 = vpop.f32.mrf.mxu0
        %v491 = vadd.f32 %v318, %v490
        %v492 = vpop.f32.mrf.mxu0
        %v493 = vpop.f32.mrf.mxu0
        %v494 = vadd.f32 %v318, %v493
        %v495 = vpop.f32.mrf.mxu0
        %496 = vmatprep.mubr.bf16.mxu0 0
        %497 = vmatmul.mubr.bf16.gmra.mxu0 %v358
        %v498 = vpop.f32.mrf.mxu0
        %v499 = vadd.f32 %v318, %v498
        %v500 = vpop.f32.mrf.mxu0
        %v501 = vpop.f32.mrf.mxu0
        %v502 = vadd.f32 %v318, %v501
        %v503 = vpop.f32.mrf.mxu0
        %504 = vmatprep.mubr.bf16.mxu0 0
        %505 = vmatmul.mubr.bf16.gmra.mxu0 %v359
        %v506 = vpop.f32.mrf.mxu0
        %v507 = vadd.f32 %v318, %v506
        %v508 = vpop.f32.mrf.mxu0
        %v509 = vpop.f32.mrf.mxu0
        %v510 = vadd.f32 %v318, %v509
        %v511 = vpop.f32.mrf.mxu0
        %512 = vdwg.mxu0
        %v513 = vmax.f32 %v451, 0.0
        %v514 = vmax.f32 %v454, 0.0
        %v515 = vmax.f32 %v459, 0.0
        %v516 = vmax.f32 %v462, 0.0
        %v517 = vmax.f32 %v467, 0.0
        %v518 = vmax.f32 %v470, 0.0
        %v519 = vmax.f32 %v475, 0.0
        %v520 = vmax.f32 %v478, 0.0
        %v521 = vmax.f32 %v483, 0.0
        %v522 = vmax.f32 %v486, 0.0
        %v523 = vmax.f32 %v491, 0.0
        %v524 = vmax.f32 %v494, 0.0
        %v525 = vmax.f32 %v499, 0.0
        %v526 = vmax.f32 %v502, 0.0
        %v527 = vmax.f32 %v507, 0.0
        %v528 = vmax.f32 %v510, 0.0
        %v529 = vld [vmem:[%s1] sm:$0xff]
        %v530 = vld [vmem:[%s1 + $0x8] sm:$0xff]
        %v531 = vld [vmem:[%s1 + $0x10] sm:$0xff]
        %v532 = vld [vmem:[%s1 + $0x18] sm:$0xff]
        %v533 = vld [vmem:[%s1 + $0x20] sm:$0xff]
        %v534 = vld [vmem:[%s1 + $0x28] sm:$0xff]
        %v535 = vld [vmem:[%s1 + $0x30] sm:$0xff]
        %v536 = vld [vmem:[%s1 + $0x38] sm:$0xff]
        %v537 = vld [vmem:[%s1 + $0x40] sm:$0xff]
        %v538 = vld [vmem:[%s1 + $0x48] sm:$0xff]
        %v539 = vld [vmem:[%s1 + $0x50] sm:$0xff]
        %v540 = vld [vmem:[%s1 + $0x58] sm:$0xff]
        %v541 = vld [vmem:[%s1 + $0x60] sm:$0xff]
        %v542 = vld [vmem:[%s1 + $0x68] sm:$0xff]
        %v543 = vld [vmem:[%s1 + $0x70] sm:$0xff]
        %v544 = vld [vmem:[%s1 + $0x78] sm:$0xff]
        %546 = vset.pattern.permute.xlu0 0
        %547 = vperm.xlu0 %546, %v529
        %v548 = vpop.permute.xlu0 %547
        %551 = vset.pattern.permute.xlu0 0
        %552 = vperm.xlu0 %551, %v530
        %v553 = vpop.permute.xlu0 %552
        %556 = vset.pattern.permute.xlu0 0
        %557 = vperm.xlu0 %556, %v531
        %v558 = vpop.permute.xlu0 %557
        %561 = vset.pattern.permute.xlu0 0
        %562 = vperm.xlu0 %561, %v532
        %v563 = vpop.permute.xlu0 %562
        %566 = vset.pattern.permute.xlu0 0
        %567 = vperm.xlu0 %566, %v533
        %v568 = vpop.permute.xlu0 %567
        %571 = vset.pattern.permute.xlu0 0
        %572 = vperm.xlu0 %571, %v534
        %v573 = vpop.permute.xlu0 %572
        %576 = vset.pattern.permute.xlu0 0
        %577 = vperm.xlu0 %576, %v535
        %v578 = vpop.permute.xlu0 %577
        %581 = vset.pattern.permute.xlu0 0
        %582 = vperm.xlu0 %581, %v536
        %v583 = vpop.permute.xlu0 %582
        %586 = vset.pattern.permute.xlu0 0
        %587 = vperm.xlu0 %586, %v537
        %v588 = vpop.permute.xlu0 %587
        %591 = vset.pattern.permute.xlu0 0
        %592 = vperm.xlu0 %591, %v538
        %v593 = vpop.permute.xlu0 %592
        %596 = vset.pattern.permute.xlu0 0
        %597 = vperm.xlu0 %596, %v539
        %v598 = vpop.permute.xlu0 %597
        %601 = vset.pattern.permute.xlu0 0
        %602 = vperm.xlu0 %601, %v540
        %v603 = vpop.permute.xlu0 %602
        %606 = vset.pattern.permute.xlu0 0
        %607 = vperm.xlu0 %606, %v541
        %v608 = vpop.permute.xlu0 %607
        %611 = vset.pattern.permute.xlu0 0
        %612 = vperm.xlu0 %611, %v542
        %v613 = vpop.permute.xlu0 %612
        %616 = vset.pattern.permute.xlu0 0
        %617 = vperm.xlu0 %616, %v543
        %v618 = vpop.permute.xlu0 %617
        %621 = vset.pattern.permute.xlu0 0
        %622 = vperm.xlu0 %621, %v544
        %v623 = vpop.permute.xlu0 %622
        %v625 = vmul.f32 %v513, %v548
        %v626 = vmul.f32 %v514, %v553
        %v627 = vmul.f32 %v515, %v558
        %v628 = vmul.f32 %v516, %v563
        %v629 = vmul.f32 %v517, %v568
        %v630 = vmul.f32 %v518, %v573
        %v631 = vmul.f32 %v519, %v578
        %v632 = vmul.f32 %v520, %v583
        %v633 = vmul.f32 %v521, %v588
        %v634 = vmul.f32 %v522, %v593
        %v635 = vmul.f32 %v523, %v598
        %v636 = vmul.f32 %v524, %v603
        %v637 = vmul.f32 %v525, %v608
        %v638 = vmul.f32 %v526, %v613
        %v639 = vmul.f32 %v527, %v618
        %v640 = vmul.f32 %v528, %v623
        %641 = vst [vmem:[#allocation2] sm:$0xf] 0
        %642 = vst [vmem:[#allocation2 + $0x4] sm:$0xf] 0
        %643 = vst [vmem:[#allocation2 + $0x8] sm:$0xf] 0
        %644 = vst [vmem:[#allocation2 + $0xc] sm:$0xf] 0
        %645 = vst [vmem:[#allocation2 + $0x10] sm:$0xf] 0
        %646 = vst [vmem:[#allocation2 + $0x14] sm:$0xf] 0
        %647 = vst [vmem:[#allocation2 + $0x18] sm:$0xf] 0
        %648 = vst [vmem:[#allocation2 + $0x1c] sm:$0xf] 0
        %649 = vst [vmem:[#allocation2 + $0x20] sm:$0xf] 0
        %650 = vst [vmem:[#allocation2 + $0x24] sm:$0xf] 0
        %651 = vst [vmem:[#allocation2 + $0x28] sm:$0xf] 0
        %652 = vst [vmem:[#allocation2 + $0x2c] sm:$0xf] 0
        %653 = vst [vmem:[#allocation2 + $0x30] sm:$0xf] 0
        %654 = vst [vmem:[#allocation2 + $0x34] sm:$0xf] 0
        %655 = vst [vmem:[#allocation2 + $0x38] sm:$0xf] 0
        %656 = vst [vmem:[#allocation2 + $0x3c] sm:$0xf] 0
        %657 = vst [vmem:[#allocation2 + $0x40] sm:$0xf] 0
        %658 = vst [vmem:[#allocation2 + $0x44] sm:$0xf] 0
        %659 = vst [vmem:[#allocation2 + $0x48] sm:$0xf] 0
        %660 = vst [vmem:[#allocation2 + $0x4c] sm:$0xf] 0
        %661 = vst [vmem:[#allocation2 + $0x50] sm:$0xf] 0
        %662 = vst [vmem:[#allocation2 + $0x54] sm:$0xf] 0
        %v663 = vpack.c.bf16 %v626, %v625
        %v664 = vpack.c.bf16 %v628, %v627
        %v665 = vpack.c.bf16 %v630, %v629
        %v666 = vpack.c.bf16 %v632, %v631
        %v667 = vpack.c.bf16 %v634, %v633
        %v668 = vpack.c.bf16 %v636, %v635
        %v669 = vpack.c.bf16 %v638, %v637
        %v670 = vpack.c.bf16 %v640, %v639
        %v679 = vunpack.c.l.b16 %v663
        %v680 = vunpack.c.h.b16 %v663
        %v681 = vunpack.c.l.b16 %v664
        %v682 = vunpack.c.h.b16 %v664
        %v683 = vunpack.c.l.b16 %v665
        %v684 = vunpack.c.h.b16 %v665
        %v685 = vunpack.c.l.b16 %v666
        %v686 = vunpack.c.h.b16 %v666
        %v687 = vunpack.c.l.b16 %v667
        %v688 = vunpack.c.h.b16 %v667
        %v689 = vunpack.c.l.b16 %v668
        %v690 = vunpack.c.h.b16 %v668
        %v691 = vunpack.c.l.b16 %v669
        %v692 = vunpack.c.h.b16 %v669
        %v693 = vunpack.c.l.b16 %v670
        %v694 = vunpack.c.h.b16 %v670
        %v695 = vpack.c.b16 %v679, %v679
        %v696 = vpack.c.b16 %v680, %v680
        %v697 = vpack.c.b16 %v681, %v681
        %v698 = vpack.c.b16 %v682, %v682
        %v699 = vpack.c.b16 %v683, %v683
        %v700 = vpack.c.b16 %v684, %v684
        %v701 = vpack.c.b16 %v685, %v685
        %v702 = vpack.c.b16 %v686, %v686
        %v703 = vpack.c.b16 %v687, %v687
        %v704 = vpack.c.b16 %v688, %v688
        %v705 = vpack.c.b16 %v689, %v689
        %v706 = vpack.c.b16 %v690, %v690
        %v707 = vpack.c.b16 %v691, %v691
        %v708 = vpack.c.b16 %v692, %v692
        %v709 = vpack.c.b16 %v693, %v693
        %v710 = vpack.c.b16 %v694, %v694
        %727 = vst [vmem:[#allocation2 + $0xc] sm:$0xf] %v695
        %728 = vst [vmem:[#allocation2 + $0x10] sm:$0xf] %v696
        %729 = vst [vmem:[#allocation2 + $0x14] sm:$0xf] %v697
        %730 = vst [vmem:[#allocation2 + $0x18] sm:$0xf] %v698
        %731 = vst [vmem:[#allocation2 + $0x1c] sm:$0xf] %v699
        %732 = vst [vmem:[#allocation2 + $0x20] sm:$0xf] %v700
        %733 = vst [vmem:[#allocation2 + $0x24] sm:$0xf] %v701
        %734 = vst [vmem:[#allocation2 + $0x28] sm:$0xf] %v702
        %735 = vst [vmem:[#allocation2 + $0x2c] sm:$0xf] %v703
        %736 = vst [vmem:[#allocation2 + $0x30] sm:$0xf] %v704
        %737 = vst [vmem:[#allocation2 + $0x34] sm:$0xf] %v705
        %738 = vst [vmem:[#allocation2 + $0x38] sm:$0xf] %v706
        %739 = vst [vmem:[#allocation2 + $0x3c] sm:$0xf] %v707
        %740 = vst [vmem:[#allocation2 + $0x40] sm:$0xf] %v708
        %741 = vst [vmem:[#allocation2 + $0x44] sm:$0xf] %v709
        %742 = vst [vmem:[#allocation2 + $0x48] sm:$0xf] %v710
        %v743 = vld [vmem:[#allocation2] sm:$0x8]
        %v744 = vld [vmem:[#allocation2 + $0x4] sm:$0xf]
        %v745 = vld [vmem:[#allocation2 + $0x8] sm:$0xf]
        %v746 = vld [vmem:[#allocation2 + $0xc] sm:$0xf]
        %v747 = vld [vmem:[#allocation2 + $0x10] sm:$0xf]
        %v748 = vld [vmem:[#allocation2 + $0x14] sm:$0xf]
        %v749 = vld [vmem:[#allocation2 + $0x18] sm:$0xf]
        %v750 = vld [vmem:[#allocation2 + $0x1c] sm:$0xf]
        %v751 = vld [vmem:[#allocation2 + $0x20] sm:$0xf]
        %v752 = vld [vmem:[#allocation2 + $0x24] sm:$0xf]
        %v753 = vld [vmem:[#allocation2 + $0x28] sm:$0xf]
        %v754 = vld [vmem:[#allocation2 + $0x2c] sm:$0xf]
        %v755 = vld [vmem:[#allocation2 + $0x30] sm:$0xf]
        %v756 = vld [vmem:[#allocation2 + $0x34] sm:$0xf]
        %v757 = vld [vmem:[#allocation2 + $0x38] sm:$0xf]
        %v758 = vld [vmem:[#allocation2 + $0x3c] sm:$0xf]
        %v759 = vld [vmem:[#allocation2 + $0x40] sm:$0xf]
        %v760 = vld [vmem:[#allocation2 + $0x44] sm:$0x1]
        %v778 = vunpack.c.l.b16 %v743
        %v779 = vunpack.c.l.b16 %v744
        %v780 = vunpack.c.l.b16 %v745
        %v781 = vunpack.c.l.b16 %v746
        %v782 = vunpack.c.l.b16 %v747
        %v783 = vunpack.c.l.b16 %v748
        %v784 = vunpack.c.l.b16 %v749
        %v785 = vunpack.c.l.b16 %v750
        %v786 = vunpack.c.l.b16 %v751
        %v787 = vunpack.c.l.b16 %v752
        %v788 = vunpack.c.l.b16 %v753
        %v789 = vunpack.c.l.b16 %v754
        %v790 = vunpack.c.l.b16 %v755
        %v791 = vunpack.c.l.b16 %v756
        %v792 = vunpack.c.l.b16 %v757
        %v793 = vunpack.c.l.b16 %v758
        %v794 = vunpack.c.l.b16 %v759
        %v795 = vpack.c.b16 %v779, %v778
        %v796 = vpack.c.b16 %v781, %v780
        %v797 = vpack.c.b16 %v783, %v782
        %v798 = vpack.c.b16 %v785, %v784
        %v799 = vpack.c.b16 %v787, %v786
        %v800 = vpack.c.b16 %v789, %v788
        %v801 = vpack.c.b16 %v791, %v790
        %v802 = vpack.c.b16 %v793, %v792
        %v803 = vpack.c.b16 %v794, %v794
        %v804 = vpack.c.b16 %v780, %v779
        %v805 = vpack.c.b16 %v782, %v781
        %v806 = vpack.c.b16 %v784, %v783
        %v807 = vpack.c.b16 %v786, %v785
        %v808 = vpack.c.b16 %v788, %v787
        %v809 = vpack.c.b16 %v790, %v789
        %v810 = vpack.c.b16 %v792, %v791
        %v811 = vpack.c.b16 %v794, %v793
        %vm812 = vsmask.f32 3328
        %v814 = vshrl.u32 %v804, 16
        %v816 = vrot.slane %v814, 4
        %v817 = vshll.u32 %v804, 16
        %v819 = vrot.slane %v817, 5
        %v820 = vor.u32 %v816, %v819
        %v822 = vshrl.u32 %v805, 16
        %v824 = vrot.slane %v822, 4
        %v825 = vshll.u32 %v805, 16
        %v827 = vrot.slane %v825, 5
        %v828 = vor.u32 %v824, %v827
        %v829 = vsel %vm812, %v820, %v828
        %v831 = vshrl.u32 %v806, 16
        %v833 = vrot.slane %v831, 4
        %v834 = vshll.u32 %v806, 16
        %v836 = vrot.slane %v834, 5
        %v837 = vor.u32 %v833, %v836
        %v838 = vsel %vm812, %v828, %v837
        %v840 = vshrl.u32 %v807, 16
        %v842 = vrot.slane %v840, 4
        %v843 = vshll.u32 %v807, 16
        %v845 = vrot.slane %v843, 5
        %v846 = vor.u32 %v842, %v845
        %v847 = vsel %vm812, %v837, %v846
        %v849 = vshrl.u32 %v808, 16
        %v851 = vrot.slane %v849, 4
        %v852 = vshll.u32 %v808, 16
        %v854 = vrot.slane %v852, 5
        %v855 = vor.u32 %v851, %v854
        %v856 = vsel %vm812, %v846, %v855
        %v858 = vshrl.u32 %v809, 16
        %v860 = vrot.slane %v858, 4
        %v861 = vshll.u32 %v809, 16
        %v863 = vrot.slane %v861, 5
        %v864 = vor.u32 %v860, %v863
        %v865 = vsel %vm812, %v855, %v864
        %v867 = vshrl.u32 %v810, 16
        %v869 = vrot.slane %v867, 4
        %v870 = vshll.u32 %v810, 16
        %v872 = vrot.slane %v870, 5
        %v873 = vor.u32 %v869, %v872
        %v874 = vsel %vm812, %v864, %v873
        %v876 = vshrl.u32 %v811, 16
        %v878 = vrot.slane %v876, 4
        %v879 = vshll.u32 %v811, 16
        %v881 = vrot.slane %v879, 5
        %v882 = vor.u32 %v878, %v881
        %v883 = vsel %vm812, %v873, %v882
        %v885 = vunpack.c.l.b16 %v760
        %v886 = vpack.c.b16 %v885, %v885
        %vm887 = vcmask 1042432
        %v888 = vrot.slane %v804, 5
        %v889 = vrot.slane %v805, 5
        %v890 = vsel %vm887, %v888, %v889
        %v891 = vrot.slane %v806, 5
        %v892 = vsel %vm887, %v889, %v891
        %v893 = vrot.slane %v807, 5
        %v894 = vsel %vm887, %v891, %v893
        %v895 = vrot.slane %v808, 5
        %v896 = vsel %vm887, %v893, %v895
        %v897 = vrot.slane %v809, 5
        %v898 = vsel %vm887, %v895, %v897
        %v899 = vrot.slane %v810, 5
        %v900 = vsel %vm887, %v897, %v899
        %v901 = vrot.slane %v811, 5
        %v902 = vsel %vm887, %v899, %v901
        %v903 = vrot.slane %v886, 5
        %v904 = vsel %vm887, %v901, %v903
        %v905 = vld [vmem:[#allocation6] sm:$0xf]
        %v906 = vld [vmem:[#allocation6 + $0x4] sm:$0xf]
        %v907 = vld [vmem:[#allocation6 + $0x8] sm:$0xf]
        %v908 = vld [vmem:[#allocation6 + $0xc] sm:$0xf]
        %v909 = vld [vmem:[#allocation6 + $0x10] sm:$0xf]
        %v910 = vld [vmem:[#allocation6 + $0x14] sm:$0xf]
        %v911 = vld [vmem:[#allocation6 + $0x18] sm:$0xf]
        %v912 = vld [vmem:[#allocation6 + $0x1c] sm:$0xf]
        %v913 = vld [vmem:[#allocation6 + $0x20] sm:$0xf]
        %v914 = vld [vmem:[#allocation6 + $0x24] sm:$0xf]
        %v915 = vld [vmem:[#allocation6 + $0x28] sm:$0xf]
        %v916 = vld [vmem:[#allocation6 + $0x2c] sm:$0xf]
        %v917 = vld [vmem:[#allocation6 + $0x30] sm:$0xf]
        %v918 = vld [vmem:[#allocation6 + $0x34] sm:$0xf]
        %v919 = vld [vmem:[#allocation6 + $0x38] sm:$0xf]
        %v920 = vld [vmem:[#allocation6 + $0x3c] sm:$0xf]
        %v921 = vld [vmem:[#allocation6 + $0x40] sm:$0xf]
        %v922 = vld [vmem:[#allocation6 + $0x44] sm:$0xf]
        %v923 = vld [vmem:[#allocation6 + $0x48] sm:$0xf]
        %v924 = vld [vmem:[#allocation6 + $0x4c] sm:$0xf]
        %v925 = vld [vmem:[#allocation6 + $0x50] sm:$0xf]
        %v926 = vld [vmem:[#allocation6 + $0x54] sm:$0xf]
        %v927 = vld [vmem:[#allocation6 + $0x58] sm:$0xf]
        %v928 = vld [vmem:[#allocation6 + $0x5c] sm:$0xf]
        %v929 = vld [vmem:[#allocation6 + $0x60] sm:$0xf]
        %v930 = vld [vmem:[#allocation6 + $0x64] sm:$0xf]
        %v931 = vld [vmem:[#allocation6 + $0x68] sm:$0xf]
        %v932 = vld [vmem:[#allocation6 + $0x6c] sm:$0xf]
        %v933 = vld [vmem:[#allocation6 + $0x70] sm:$0xf]
        %v934 = vld [vmem:[#allocation6 + $0x74] sm:$0xf]
        %v935 = vld [vmem:[#allocation6 + $0x78] sm:$0xf]
        %v936 = vld [vmem:[#allocation6 + $0x7c] sm:$0xf]
        %v937 = vld [vmem:[#allocation6 + $0x80] sm:$0xf]
        %v938 = vld [vmem:[#allocation6 + $0x84] sm:$0xf]
        %v939 = vld [vmem:[#allocation6 + $0x88] sm:$0xf]
        %v940 = vld [vmem:[#allocation6 + $0x8c] sm:$0xf]
        %v941 = vld [vmem:[#allocation6 + $0x90] sm:$0xf]
        %v942 = vld [vmem:[#allocation6 + $0x94] sm:$0xf]
        %v943 = vld [vmem:[#allocation6 + $0x98] sm:$0xf]
        %v944 = vld [vmem:[#allocation6 + $0x9c] sm:$0xf]
        %v945 = vld [vmem:[#allocation6 + $0xa0] sm:$0xf]
        %v946 = vld [vmem:[#allocation6 + $0xa4] sm:$0xf]
        %v947 = vld [vmem:[#allocation6 + $0xa8] sm:$0xf]
        %v948 = vld [vmem:[#allocation6 + $0xac] sm:$0xf]
        %v949 = vld [vmem:[#allocation6 + $0xb0] sm:$0xf]
        %v950 = vld [vmem:[#allocation6 + $0xb4] sm:$0xf]
        %v951 = vld [vmem:[#allocation6 + $0xb8] sm:$0xf]
        %v952 = vld [vmem:[#allocation6 + $0xbc] sm:$0xf]
        %v953 = vld [vmem:[#allocation2 + $0x8] sm:$0x8]
        %v954 = vld [vmem:[#allocation2 + $0x44] sm:$0xf]
        %v955 = vld [vmem:[#allocation2 + $0x48] sm:$0xf]
        %v956 = vld [vmem:[#allocation2 + $0x4c] sm:$0x1]
        %v960 = vunpack.c.l.b16 %v953
        %v961 = vunpack.c.l.b16 %v954
        %v962 = vunpack.c.l.b16 %v955
        %v963 = vpack.c.b16 %v781, %v960
        %v964 = vpack.c.b16 %v961, %v794
        %v965 = vpack.c.b16 %v962, %v962
        %v966 = vpack.c.b16 %v962, %v961
        %v968 = vshrl.u32 %v966, 16
        %v970 = vrot.slane %v968, 4
        %v971 = vshll.u32 %v966, 16
        %v973 = vrot.slane %v971, 5
        %v974 = vor.u32 %v970, %v973
        %v975 = vsel %vm812, %v882, %v974
        %v977 = vunpack.c.l.b16 %v956
        %v978 = vpack.c.b16 %v977, %v977
        %v979 = vrot.slane %v966, 5
        %v980 = vsel %vm887, %v901, %v979
        %v981 = vrot.slane %v978, 5
        %v982 = vsel %vm887, %v979, %v981
        %s983 = scalar_lea.vmem [#allocation6], 192
        %v984 = vld [vmem:[%s983] sm:$0xf]
        %v985 = vld [vmem:[%s983 + $0x4] sm:$0xf]
        %v986 = vld [vmem:[%s983 + $0x8] sm:$0xf]
        %v987 = vld [vmem:[%s983 + $0xc] sm:$0xf]
        %v988 = vld [vmem:[%s983 + $0x10] sm:$0xf]
        %v989 = vld [vmem:[%s983 + $0x14] sm:$0xf]
        %v990 = vld [vmem:[%s983 + $0x18] sm:$0xf]
        %v991 = vld [vmem:[%s983 + $0x1c] sm:$0xf]
        %v992 = vld [vmem:[%s983 + $0x20] sm:$0xf]
        %v993 = vld [vmem:[%s983 + $0x24] sm:$0xf]
        %v994 = vld [vmem:[%s983 + $0x28] sm:$0xf]
        %v995 = vld [vmem:[%s983 + $0x2c] sm:$0xf]
        %v996 = vld [vmem:[%s983 + $0x30] sm:$0xf]
        %v997 = vld [vmem:[%s983 + $0x34] sm:$0xf]
        %v998 = vld [vmem:[%s983 + $0x38] sm:$0xf]
        %v999 = vld [vmem:[%s983 + $0x3c] sm:$0xf]
        %v1000 = vld [vmem:[%s983 + $0x40] sm:$0xf]
        %v1001 = vld [vmem:[%s983 + $0x44] sm:$0xf]
        %v1002 = vld [vmem:[%s983 + $0x48] sm:$0xf]
        %v1003 = vld [vmem:[%s983 + $0x4c] sm:$0xf]
        %v1004 = vld [vmem:[%s983 + $0x50] sm:$0xf]
        %v1005 = vld [vmem:[%s983 + $0x54] sm:$0xf]
        %v1006 = vld [vmem:[%s983 + $0x58] sm:$0xf]
        %v1007 = vld [vmem:[%s983 + $0x5c] sm:$0xf]
        %v1008 = vld [vmem:[%s983 + $0x60] sm:$0xf]
        %v1009 = vld [vmem:[%s983 + $0x64] sm:$0xf]
        %v1010 = vld [vmem:[%s983 + $0x68] sm:$0xf]
        %v1011 = vld [vmem:[%s983 + $0x6c] sm:$0xf]
        %v1012 = vld [vmem:[%s983 + $0x70] sm:$0xf]
        %v1013 = vld [vmem:[%s983 + $0x74] sm:$0xf]
        %v1014 = vld [vmem:[%s983 + $0x78] sm:$0xf]
        %v1015 = vld [vmem:[%s983 + $0x7c] sm:$0xf]
        %v1016 = vld [vmem:[%s983 + $0x80] sm:$0xf]
        %v1017 = vld [vmem:[%s983 + $0x84] sm:$0xf]
        %v1018 = vld [vmem:[%s983 + $0x88] sm:$0xf]
        %v1019 = vld [vmem:[%s983 + $0x8c] sm:$0xf]
        %v1020 = vld [vmem:[%s983 + $0x90] sm:$0xf]
        %v1021 = vld [vmem:[%s983 + $0x94] sm:$0xf]
        %v1022 = vld [vmem:[%s983 + $0x98] sm:$0xf]
        %v1023 = vld [vmem:[%s983 + $0x9c] sm:$0xf]
        %v1024 = vld [vmem:[%s983 + $0xa0] sm:$0xf]
        %v1025 = vld [vmem:[%s983 + $0xa4] sm:$0xf]
        %v1026 = vld [vmem:[%s983 + $0xa8] sm:$0xf]
        %v1027 = vld [vmem:[%s983 + $0xac] sm:$0xf]
        %v1028 = vld [vmem:[%s983 + $0xb0] sm:$0xf]
        %v1029 = vld [vmem:[%s983 + $0xb4] sm:$0xf]
        %v1030 = vld [vmem:[%s983 + $0xb8] sm:$0xf]
        %v1031 = vld [vmem:[%s983 + $0xbc] sm:$0xf]
        %vm1032 = vsmask.f32 4352
        %v1034 = vshrl.u32 %v963, 16
        %v1036 = vrot.slane %v1034, 3
        %v1037 = vshll.u32 %v963, 16
        %v1039 = vrot.slane %v1037, 4
        %v1040 = vor.u32 %v1036, %v1039
        %v1042 = vshrl.u32 %v797, 16
        %v1044 = vrot.slane %v1042, 3
        %v1045 = vshll.u32 %v797, 16
        %v1047 = vrot.slane %v1045, 4
        %v1048 = vor.u32 %v1044, %v1047
        %v1049 = vsel %vm1032, %v1040, %v1048
        %v1051 = vshrl.u32 %v828, 16
        %v1053 = vrot.slane %v1051, 3
        %v1054 = vshll.u32 %v828, 16
        %v1056 = vrot.slane %v1054, 4
        %v1057 = vor.u32 %v1053, %v1056
        %v1059 = vshrl.u32 %v838, 16
        %v1061 = vrot.slane %v1059, 3
        %v1062 = vshll.u32 %v838, 16
        %v1064 = vrot.slane %v1062, 4
        %v1065 = vor.u32 %v1061, %v1064
        %v1066 = vsel %vm1032, %v1057, %v1065
        %v1068 = vshrl.u32 %v889, 16
        %v1070 = vrot.slane %v1068, 3
        %v1071 = vshll.u32 %v889, 16
        %v1073 = vrot.slane %v1071, 4
        %v1074 = vor.u32 %v1070, %v1073
        %v1076 = vshrl.u32 %v892, 16
        %v1078 = vrot.slane %v1076, 3
        %v1079 = vshll.u32 %v892, 16
        %v1081 = vrot.slane %v1079, 4
        %v1082 = vor.u32 %v1078, %v1081
        %v1083 = vsel %vm1032, %v1074, %v1082
        %v1085 = vshrl.u32 %v798, 16
        %v1087 = vrot.slane %v1085, 3
        %v1088 = vshll.u32 %v798, 16
        %v1090 = vrot.slane %v1088, 4
        %v1091 = vor.u32 %v1087, %v1090
        %v1092 = vsel %vm1032, %v1048, %v1091
        %v1094 = vshrl.u32 %v847, 16
        %v1096 = vrot.slane %v1094, 3
        %v1097 = vshll.u32 %v847, 16
        %v1099 = vrot.slane %v1097, 4
        %v1100 = vor.u32 %v1096, %v1099
        %v1101 = vsel %vm1032, %v1065, %v1100
        %v1103 = vshrl.u32 %v894, 16
        %v1105 = vrot.slane %v1103, 3
        %v1106 = vshll.u32 %v894, 16
        %v1108 = vrot.slane %v1106, 4
        %v1109 = vor.u32 %v1105, %v1108
        %v1110 = vsel %vm1032, %v1082, %v1109
        %v1112 = vshrl.u32 %v799, 16
        %v1114 = vrot.slane %v1112, 3
        %v1115 = vshll.u32 %v799, 16
        %v1117 = vrot.slane %v1115, 4
        %v1118 = vor.u32 %v1114, %v1117
        %v1119 = vsel %vm1032, %v1091, %v1118
        %v1121 = vshrl.u32 %v856, 16
        %v1123 = vrot.slane %v1121, 3
        %v1124 = vshll.u32 %v856, 16
        %v1126 = vrot.slane %v1124, 4
        %v1127 = vor.u32 %v1123, %v1126
        %v1128 = vsel %vm1032, %v1100, %v1127
        %v1130 = vshrl.u32 %v896, 16
        %v1132 = vrot.slane %v1130, 3
        %v1133 = vshll.u32 %v896, 16
        %v1135 = vrot.slane %v1133, 4
        %v1136 = vor.u32 %v1132, %v1135
        %v1137 = vsel %vm1032, %v1109, %v1136
        %v1139 = vshrl.u32 %v800, 16
        %v1141 = vrot.slane %v1139, 3
        %v1142 = vshll.u32 %v800, 16
        %v1144 = vrot.slane %v1142, 4
        %v1145 = vor.u32 %v1141, %v1144
        %v1146 = vsel %vm1032, %v1118, %v1145
        %v1148 = vshrl.u32 %v865, 16
        %v1150 = vrot.slane %v1148, 3
        %v1151 = vshll.u32 %v865, 16
        %v1153 = vrot.slane %v1151, 4
        %v1154 = vor.u32 %v1150, %v1153
        %v1155 = vsel %vm1032, %v1127, %v1154
        %v1157 = vshrl.u32 %v898, 16
        %v1159 = vrot.slane %v1157, 3
        %v1160 = vshll.u32 %v898, 16
        %v1162 = vrot.slane %v1160, 4
        %v1163 = vor.u32 %v1159, %v1162
        %v1164 = vsel %vm1032, %v1136, %v1163
        %v1166 = vshrl.u32 %v801, 16
        %v1168 = vrot.slane %v1166, 3
        %v1169 = vshll.u32 %v801, 16
        %v1171 = vrot.slane %v1169, 4
        %v1172 = vor.u32 %v1168, %v1171
        %v1173 = vsel %vm1032, %v1145, %v1172
        %v1175 = vshrl.u32 %v874, 16
        %v1177 = vrot.slane %v1175, 3
        %v1178 = vshll.u32 %v874, 16
        %v1180 = vrot.slane %v1178, 4
        %v1181 = vor.u32 %v1177, %v1180
        %v1182 = vsel %vm1032, %v1154, %v1181
        %v1184 = vshrl.u32 %v900, 16
        %v1186 = vrot.slane %v1184, 3
        %v1187 = vshll.u32 %v900, 16
        %v1189 = vrot.slane %v1187, 4
        %v1190 = vor.u32 %v1186, %v1189
        %v1191 = vsel %vm1032, %v1163, %v1190
        %v1193 = vshrl.u32 %v802, 16
        %v1195 = vrot.slane %v1193, 3
        %v1196 = vshll.u32 %v802, 16
        %v1198 = vrot.slane %v1196, 4
        %v1199 = vor.u32 %v1195, %v1198
        %v1200 = vsel %vm1032, %v1172, %v1199
        %v1202 = vshrl.u32 %v883, 16
        %v1204 = vrot.slane %v1202, 3
        %v1205 = vshll.u32 %v883, 16
        %v1207 = vrot.slane %v1205, 4
        %v1208 = vor.u32 %v1204, %v1207
        %v1209 = vsel %vm1032, %v1181, %v1208
        %v1211 = vshrl.u32 %v902, 16
        %v1213 = vrot.slane %v1211, 3
        %v1214 = vshll.u32 %v902, 16
        %v1216 = vrot.slane %v1214, 4
        %v1217 = vor.u32 %v1213, %v1216
        %v1218 = vsel %vm1032, %v1190, %v1217
        %v1220 = vshrl.u32 %v964, 16
        %v1222 = vrot.slane %v1220, 3
        %v1223 = vshll.u32 %v964, 16
        %v1225 = vrot.slane %v1223, 4
        %v1226 = vor.u32 %v1222, %v1225
        %v1227 = vsel %vm1032, %v1199, %v1226
        %v1229 = vshrl.u32 %v975, 16
        %v1231 = vrot.slane %v1229, 3
        %v1232 = vshll.u32 %v975, 16
        %v1234 = vrot.slane %v1232, 4
        %v1235 = vor.u32 %v1231, %v1234
        %v1236 = vsel %vm1032, %v1208, %v1235
        %v1238 = vshrl.u32 %v980, 16
        %v1240 = vrot.slane %v1238, 3
        %v1241 = vshll.u32 %v980, 16
        %v1243 = vrot.slane %v1241, 4
        %v1244 = vor.u32 %v1240, %v1243
        %v1245 = vsel %vm1032, %v1217, %v1244
        %v1247 = vshrl.u32 %v965, 16
        %v1249 = vrot.slane %v1247, 3
        %v1250 = vshll.u32 %v965, 16
        %v1252 = vrot.slane %v1250, 4
        %v1253 = vor.u32 %v1249, %v1252
        %v1254 = vsel %vm1032, %v1226, %v1253
        %v1256 = vshrl.u32 %v974, 16
        %v1258 = vrot.slane %v1256, 3
        %v1259 = vshll.u32 %v974, 16
        %v1261 = vrot.slane %v1259, 4
        %v1262 = vor.u32 %v1258, %v1261
        %v1263 = vsel %vm1032, %v1235, %v1262
        %v1265 = vshrl.u32 %v982, 16
        %v1267 = vrot.slane %v1265, 3
        %v1268 = vshll.u32 %v982, 16
        %v1270 = vrot.slane %v1268, 4
        %v1271 = vor.u32 %v1267, %v1270
        %v1272 = vsel %vm1032, %v1244, %v1271
        %v1345 = vunpack.c.l.b16 %v984
        %v1346 = vunpack.c.l.b16 %v985
        %v1347 = vunpack.c.l.b16 %v986
        %v1348 = vunpack.c.l.b16 %v987
        %v1349 = vunpack.c.l.b16 %v988
        %v1350 = vunpack.c.l.b16 %v989
        %v1351 = vunpack.c.l.b16 %v990
        %v1352 = vunpack.c.l.b16 %v991
        %v1353 = vunpack.c.l.b16 %v992
        %v1354 = vunpack.c.l.b16 %v993
        %v1355 = vunpack.c.l.b16 %v994
        %v1356 = vunpack.c.l.b16 %v995
        %v1357 = vunpack.c.l.b16 %v996
        %v1358 = vunpack.c.l.b16 %v997
        %v1359 = vunpack.c.l.b16 %v998
        %v1360 = vunpack.c.l.b16 %v999
        %v1361 = vunpack.c.l.b16 %v1000
        %v1362 = vunpack.c.l.b16 %v1001
        %v1363 = vunpack.c.l.b16 %v1002
        %v1364 = vunpack.c.l.b16 %v1003
        %v1365 = vunpack.c.l.b16 %v1004
        %v1366 = vunpack.c.l.b16 %v1005
        %v1367 = vunpack.c.l.b16 %v1006
        %v1368 = vunpack.c.l.b16 %v1007
        %v1369 = vunpack.c.l.b16 %v1008
        %v1370 = vunpack.c.l.b16 %v1009
        %v1371 = vunpack.c.l.b16 %v1010
        %v1372 = vunpack.c.l.b16 %v1011
        %v1373 = vunpack.c.l.b16 %v1012
        %v1374 = vunpack.c.l.b16 %v1013
        %v1375 = vunpack.c.l.b16 %v1014
        %v1376 = vunpack.c.l.b16 %v1015
        %v1377 = vunpack.c.l.b16 %v1016
        %v1378 = vunpack.c.l.b16 %v1017
        %v1379 = vunpack.c.l.b16 %v1018
        %v1380 = vunpack.c.l.b16 %v1019
        %v1381 = vunpack.c.l.b16 %v1020
        %v1382 = vunpack.c.l.b16 %v1021
        %v1383 = vunpack.c.l.b16 %v1022
        %v1384 = vunpack.c.l.b16 %v1023
        %v1385 = vunpack.c.l.b16 %v1024
        %v1386 = vunpack.c.l.b16 %v1025
        %v1387 = vunpack.c.l.b16 %v1026
        %v1388 = vunpack.c.l.b16 %v1027
        %v1389 = vunpack.c.l.b16 %v1028
        %v1390 = vunpack.c.l.b16 %v1029
        %v1391 = vunpack.c.l.b16 %v1030
        %v1392 = vunpack.c.l.b16 %v1031
        %v1393 = vpack.c.b16 %v1346, %v1345
        %v1394 = vpack.c.b16 %v1348, %v1347
        %v1395 = vpack.c.b16 %v1350, %v1349
        %v1396 = vpack.c.b16 %v1352, %v1351
        %v1397 = vpack.c.b16 %v1354, %v1353
        %v1398 = vpack.c.b16 %v1356, %v1355
        %v1399 = vpack.c.b16 %v1358, %v1357
        %v1400 = vpack.c.b16 %v1360, %v1359
        %v1401 = vpack.c.b16 %v1362, %v1361
        %v1402 = vpack.c.b16 %v1364, %v1363
        %v1403 = vpack.c.b16 %v1366, %v1365
        %v1404 = vpack.c.b16 %v1368, %v1367
        %v1405 = vpack.c.b16 %v1370, %v1369
        %v1406 = vpack.c.b16 %v1372, %v1371
        %v1407 = vpack.c.b16 %v1374, %v1373
        %v1408 = vpack.c.b16 %v1376, %v1375
        %v1409 = vpack.c.b16 %v1378, %v1377
        %v1410 = vpack.c.b16 %v1380, %v1379
        %v1411 = vpack.c.b16 %v1382, %v1381
        %v1412 = vpack.c.b16 %v1384, %v1383
        %v1413 = vpack.c.b16 %v1386, %v1385
        %v1414 = vpack.c.b16 %v1388, %v1387
        %v1415 = vpack.c.b16 %v1390, %v1389
        %v1416 = vpack.c.b16 %v1392, %v1391
        %1441 = vmatprep.subr.bf16.mxu0 0
        %1442 = vmatpush1.bf16.msra.mxu0 %v1400
        %1443 = vmatprep.subr.bf16.mxu0 0
        %1444 = vmatpush1.bf16.msra.mxu0 %v1399
        %1445 = vmatprep.subr.bf16.mxu0 0
        %1446 = vmatpush1.bf16.msra.mxu0 %v1398
        %1447 = vmatprep.subr.bf16.mxu0 0
        %1448 = vmatpush1.bf16.msra.mxu0 %v1397
        %1449 = vmatprep.subr.bf16.mxu0 0
        %1450 = vmatpush1.bf16.msra.mxu0 %v1396
        %1451 = vmatprep.subr.bf16.mxu0 0
        %1452 = vmatpush1.bf16.msra.mxu0 %v1395
        %1453 = vmatprep.subr.bf16.mxu0 0
        %1454 = vmatpush1.bf16.msra.mxu0 %v1394
        %1455 = vmatprep.subr.bf16.mxu0 0
        %1456 = vmatpush1.bf16.msra.mxu0 %v1393
        %1457 = vmatprep.subr.bf16.mxu0 0
        %1458 = vmatpush2.bf16.msra.mxu0 %v1408
        %1459 = vmatprep.subr.bf16.mxu0 0
        %1460 = vmatpush2.bf16.msra.mxu0 %v1407
        %1461 = vmatprep.subr.bf16.mxu0 0
        %1462 = vmatpush2.bf16.msra.mxu0 %v1406
        %1463 = vmatprep.subr.bf16.mxu0 0
        %1464 = vmatpush2.bf16.msra.mxu0 %v1405
        %1465 = vmatprep.subr.bf16.mxu0 0
        %1466 = vmatpush2.bf16.msra.mxu0 %v1404
        %1467 = vmatprep.subr.bf16.mxu0 0
        %1468 = vmatpush2.bf16.msra.mxu0 %v1403
        %1469 = vmatprep.subr.bf16.mxu0 0
        %1470 = vmatpush2.bf16.msra.mxu0 %v1402
        %1471 = vmatprep.subr.bf16.mxu0 0
        %1472 = vmatpush2.bf16.msra.mxu0 %v1401
        %1473 = vmatprep.mubr.bf16.mxu0 %v1066
        %1474 = vmatmul.mubr.bf16.gmra.mxu0 %v1049
        %v1475 = vpop.f32.mrf.mxu0
        %v1476 = vadd.f32 0.0, %v1475
        %v1477 = vpop.f32.mrf.mxu0
        %v1478 = vpop.f32.mrf.mxu0
        %v1479 = vadd.f32 0.0, %v1478
        %v1480 = vpop.f32.mrf.mxu0
        %1481 = vmatprep.mubr.bf16.mxu0 %v1101
        %1482 = vmatmul.mubr.bf16.gmra.mxu0 %v1092
        %v1483 = vpop.f32.mrf.mxu0
        %v1484 = vadd.f32 0.0, %v1483
        %v1485 = vpop.f32.mrf.mxu0
        %v1486 = vpop.f32.mrf.mxu0
        %v1487 = vadd.f32 0.0, %v1486
        %v1488 = vpop.f32.mrf.mxu0
        %1489 = vmatprep.mubr.bf16.mxu0 %v1128
        %1490 = vmatmul.mubr.bf16.gmra.mxu0 %v1119
        %v1491 = vpop.f32.mrf.mxu0
        %v1492 = vadd.f32 0.0, %v1491
        %v1493 = vpop.f32.mrf.mxu0
        %v1494 = vpop.f32.mrf.mxu0
        %v1495 = vadd.f32 0.0, %v1494
        %v1496 = vpop.f32.mrf.mxu0
        %1497 = vmatprep.mubr.bf16.mxu0 %v1155
        %1498 = vmatmul.mubr.bf16.gmra.mxu0 %v1146
        %v1499 = vpop.f32.mrf.mxu0
        %v1500 = vadd.f32 0.0, %v1499
        %v1501 = vpop.f32.mrf.mxu0
        %v1502 = vpop.f32.mrf.mxu0
        %v1503 = vadd.f32 0.0, %v1502
        %v1504 = vpop.f32.mrf.mxu0
        %1505 = vmatprep.mubr.bf16.mxu0 %v1182
        %1506 = vmatmul.mubr.bf16.gmra.mxu0 %v1173
        %v1507 = vpop.f32.mrf.mxu0
        %v1508 = vadd.f32 0.0, %v1507
        %v1509 = vpop.f32.mrf.mxu0
        %v1510 = vpop.f32.mrf.mxu0
        %v1511 = vadd.f32 0.0, %v1510
        %v1512 = vpop.f32.mrf.mxu0
        %1513 = vmatprep.mubr.bf16.mxu0 %v1209
        %1514 = vmatmul.mubr.bf16.gmra.mxu0 %v1200
        %v1515 = vpop.f32.mrf.mxu0
        %v1516 = vadd.f32 0.0, %v1515
        %v1517 = vpop.f32.mrf.mxu0
        %v1518 = vpop.f32.mrf.mxu0
        %v1519 = vadd.f32 0.0, %v1518
        %v1520 = vpop.f32.mrf.mxu0
        %1521 = vmatprep.mubr.bf16.mxu0 %v1236
        %1522 = vmatmul.mubr.bf16.gmra.mxu0 %v1227
        %v1523 = vpop.f32.mrf.mxu0
        %v1524 = vadd.f32 0.0, %v1523
        %v1525 = vpop.f32.mrf.mxu0
        %v1526 = vpop.f32.mrf.mxu0
        %v1527 = vadd.f32 0.0, %v1526
        %v1528 = vpop.f32.mrf.mxu0
        %1529 = vmatprep.mubr.bf16.mxu0 %v1263
        %1530 = vmatmul.mubr.bf16.gmra.mxu0 %v1254
        %v1531 = vpop.f32.mrf.mxu0
        %v1532 = vadd.f32 0.0, %v1531
        %v1533 = vpop.f32.mrf.mxu0
        %v1534 = vpop.f32.mrf.mxu0
        %v1535 = vadd.f32 0.0, %v1534
        %v1536 = vpop.f32.mrf.mxu0
        %1537 = vdwg.mxu0
        %1538 = vmatprep.subr.bf16.mxu0 0
        %1539 = vmatpush1.bf16.msra.mxu0 %v1416
        %1540 = vmatprep.subr.bf16.mxu0 0
        %1541 = vmatpush1.bf16.msra.mxu0 %v1415
        %1542 = vmatprep.subr.bf16.mxu0 0
        %1543 = vmatpush1.bf16.msra.mxu0 %v1414
        %1544 = vmatprep.subr.bf16.mxu0 0
        %1545 = vmatpush1.bf16.msra.mxu0 %v1413
        %1546 = vmatprep.subr.bf16.mxu0 0
        %1547 = vmatpush1.bf16.msra.mxu0 %v1412
        %1548 = vmatprep.subr.bf16.mxu0 0
        %1549 = vmatpush1.bf16.msra.mxu0 %v1411
        %1550 = vmatprep.subr.bf16.mxu0 0
        %1551 = vmatpush1.bf16.msra.mxu0 %v1410
        %1552 = vmatprep.subr.bf16.mxu0 0
        %1553 = vmatpush1.bf16.msra.mxu0 %v1409
        %1554 = vmatprep.subr.bf16.mxu0 0
        %1555 = vmatpush2.bf16.msra.mxu0 0
        %1556 = vmatprep.subr.bf16.mxu0 0
        %1557 = vmatpush2.bf16.msra.mxu0 0
        %1558 = vmatprep.subr.bf16.mxu0 0
        %1559 = vmatpush2.bf16.msra.mxu0 0
        %1560 = vmatprep.subr.bf16.mxu0 0
        %1561 = vmatpush2.bf16.msra.mxu0 0
        %1562 = vmatprep.subr.bf16.mxu0 0
        %1563 = vmatpush2.bf16.msra.mxu0 0
        %1564 = vmatprep.subr.bf16.mxu0 0
        %1565 = vmatpush2.bf16.msra.mxu0 0
        %1566 = vmatprep.subr.bf16.mxu0 0
        %1567 = vmatpush2.bf16.msra.mxu0 0
        %1568 = vmatprep.subr.bf16.mxu0 0
        %1569 = vmatpush2.bf16.msra.mxu0 0
        %1570 = vmatprep.mubr.bf16.mxu0 0
        %1571 = vmatmul.mubr.bf16.gmra.mxu0 %v1083
        %v1572 = vpop.f32.mrf.mxu0
        %v1573 = vadd.f32 %v1476, %v1572
        %v1574 = vpop.f32.mrf.mxu0
        %v1575 = vpop.f32.mrf.mxu0
        %v1576 = vadd.f32 %v1479, %v1575
        %v1577 = vpop.f32.mrf.mxu0
        %1578 = vmatprep.mubr.bf16.mxu0 0
        %1579 = vmatmul.mubr.bf16.gmra.mxu0 %v1110
        %v1580 = vpop.f32.mrf.mxu0
        %v1581 = vadd.f32 %v1484, %v1580
        %v1582 = vpop.f32.mrf.mxu0
        %v1583 = vpop.f32.mrf.mxu0
        %v1584 = vadd.f32 %v1487, %v1583
        %v1585 = vpop.f32.mrf.mxu0
        %1586 = vmatprep.mubr.bf16.mxu0 0
        %1587 = vmatmul.mubr.bf16.gmra.mxu0 %v1137
        %v1588 = vpop.f32.mrf.mxu0
        %v1589 = vadd.f32 %v1492, %v1588
        %v1590 = vpop.f32.mrf.mxu0
        %v1591 = vpop.f32.mrf.mxu0
        %v1592 = vadd.f32 %v1495, %v1591
        %v1593 = vpop.f32.mrf.mxu0
        %1594 = vmatprep.mubr.bf16.mxu0 0
        %1595 = vmatmul.mubr.bf16.gmra.mxu0 %v1164
        %v1596 = vpop.f32.mrf.mxu0
        %v1597 = vadd.f32 %v1500, %v1596
        %v1598 = vpop.f32.mrf.mxu0
        %v1599 = vpop.f32.mrf.mxu0
        %v1600 = vadd.f32 %v1503, %v1599
        %v1601 = vpop.f32.mrf.mxu0
        %1602 = vmatprep.mubr.bf16.mxu0 0
        %1603 = vmatmul.mubr.bf16.gmra.mxu0 %v1191
        %v1604 = vpop.f32.mrf.mxu0
        %v1605 = vadd.f32 %v1508, %v1604
        %v1606 = vpop.f32.mrf.mxu0
        %v1607 = vpop.f32.mrf.mxu0
        %v1608 = vadd.f32 %v1511, %v1607
        %v1609 = vpop.f32.mrf.mxu0
        %1610 = vmatprep.mubr.bf16.mxu0 0
        %1611 = vmatmul.mubr.bf16.gmra.mxu0 %v1218
        %v1612 = vpop.f32.mrf.mxu0
        %v1613 = vadd.f32 %v1516, %v1612
        %v1614 = vpop.f32.mrf.mxu0
        %v1615 = vpop.f32.mrf.mxu0
        %v1616 = vadd.f32 %v1519, %v1615
        %v1617 = vpop.f32.mrf.mxu0
        %1618 = vmatprep.mubr.bf16.mxu0 0
        %1619 = vmatmul.mubr.bf16.gmra.mxu0 %v1245
        %v1620 = vpop.f32.mrf.mxu0
        %v1621 = vadd.f32 %v1524, %v1620
        %v1622 = vpop.f32.mrf.mxu0
        %v1623 = vpop.f32.mrf.mxu0
        %v1624 = vadd.f32 %v1527, %v1623
        %v1625 = vpop.f32.mrf.mxu0
        %1626 = vmatprep.mubr.bf16.mxu0 0
        %1627 = vmatmul.mubr.bf16.gmra.mxu0 %v1272
        %v1628 = vpop.f32.mrf.mxu0
        %v1629 = vadd.f32 %v1532, %v1628
        %v1630 = vpop.f32.mrf.mxu0
        %v1631 = vpop.f32.mrf.mxu0
        %v1632 = vadd.f32 %v1535, %v1631
        %v1633 = vpop.f32.mrf.mxu0
        %1634 = vdwg.mxu0
        %v1636 = vshrl.u32 %v795, 16
        %v1638 = vrot.slane %v1636, 3
        %v1639 = vshll.u32 %v795, 16
        %v1641 = vrot.slane %v1639, 4
        %v1642 = vor.u32 %v1638, %v1641
        %v1644 = vshrl.u32 %v796, 16
        %v1646 = vrot.slane %v1644, 3
        %v1647 = vshll.u32 %v796, 16
        %v1649 = vrot.slane %v1647, 4
        %v1650 = vor.u32 %v1646, %v1649
        %v1651 = vsel %vm1032, %v1642, %v1650
        %v1653 = vshrl.u32 %v820, 16
        %v1655 = vrot.slane %v1653, 3
        %v1656 = vshll.u32 %v820, 16
        %v1658 = vrot.slane %v1656, 4
        %v1659 = vor.u32 %v1655, %v1658
        %v1661 = vshrl.u32 %v829, 16
        %v1663 = vrot.slane %v1661, 3
        %v1664 = vshll.u32 %v829, 16
        %v1666 = vrot.slane %v1664, 4
        %v1667 = vor.u32 %v1663, %v1666
        %v1668 = vsel %vm1032, %v1659, %v1667
        %v1670 = vshrl.u32 %v888, 16
        %v1672 = vrot.slane %v1670, 3
        %v1673 = vshll.u32 %v888, 16
        %v1675 = vrot.slane %v1673, 4
        %v1676 = vor.u32 %v1672, %v1675
        %v1678 = vshrl.u32 %v890, 16
        %v1680 = vrot.slane %v1678, 3
        %v1681 = vshll.u32 %v890, 16
        %v1683 = vrot.slane %v1681, 4
        %v1684 = vor.u32 %v1680, %v1683
        %v1685 = vsel %vm1032, %v1676, %v1684
        %v1686 = vsel %vm1032, %v1650, %v1048
        %v1687 = vsel %vm1032, %v1667, %v1065
        %v1688 = vsel %vm1032, %v1684, %v1082
        %v1690 = vshrl.u32 %v803, 16
        %v1692 = vrot.slane %v1690, 3
        %v1693 = vshll.u32 %v803, 16
        %v1695 = vrot.slane %v1693, 4
        %v1696 = vor.u32 %v1692, %v1695
        %v1697 = vsel %vm1032, %v1199, %v1696
        %v1699 = vshrl.u32 %v882, 16
        %v1701 = vrot.slane %v1699, 3
        %v1702 = vshll.u32 %v882, 16
        %v1704 = vrot.slane %v1702, 4
        %v1705 = vor.u32 %v1701, %v1704
        %v1706 = vsel %vm1032, %v1208, %v1705
        %v1708 = vshrl.u32 %v904, 16
        %v1710 = vrot.slane %v1708, 3
        %v1711 = vshll.u32 %v904, 16
        %v1713 = vrot.slane %v1711, 4
        %v1714 = vor.u32 %v1710, %v1713
        %v1715 = vsel %vm1032, %v1217, %v1714
        %v1773 = vunpack.c.l.b16 %v905
        %v1774 = vunpack.c.l.b16 %v906
        %v1775 = vunpack.c.l.b16 %v907
        %v1776 = vunpack.c.l.b16 %v908
        %v1777 = vunpack.c.l.b16 %v909
        %v1778 = vunpack.c.l.b16 %v910
        %v1779 = vunpack.c.l.b16 %v911
        %v1780 = vunpack.c.l.b16 %v912
        %v1781 = vunpack.c.l.b16 %v913
        %v1782 = vunpack.c.l.b16 %v914
        %v1783 = vunpack.c.l.b16 %v915
        %v1784 = vunpack.c.l.b16 %v916
        %v1785 = vunpack.c.l.b16 %v917
        %v1786 = vunpack.c.l.b16 %v918
        %v1787 = vunpack.c.l.b16 %v919
        %v1788 = vunpack.c.l.b16 %v920
        %v1789 = vunpack.c.l.b16 %v921
        %v1790 = vunpack.c.l.b16 %v922
        %v1791 = vunpack.c.l.b16 %v923
        %v1792 = vunpack.c.l.b16 %v924
        %v1793 = vunpack.c.l.b16 %v925
        %v1794 = vunpack.c.l.b16 %v926
        %v1795 = vunpack.c.l.b16 %v927
        %v1796 = vunpack.c.l.b16 %v928
        %v1797 = vunpack.c.l.b16 %v929
        %v1798 = vunpack.c.l.b16 %v930
        %v1799 = vunpack.c.l.b16 %v931
        %v1800 = vunpack.c.l.b16 %v932
        %v1801 = vunpack.c.l.b16 %v933
        %v1802 = vunpack.c.l.b16 %v934
        %v1803 = vunpack.c.l.b16 %v935
        %v1804 = vunpack.c.l.b16 %v936
        %v1805 = vunpack.c.l.b16 %v937
        %v1806 = vunpack.c.l.b16 %v938
        %v1807 = vunpack.c.l.b16 %v939
        %v1808 = vunpack.c.l.b16 %v940
        %v1809 = vunpack.c.l.b16 %v941
        %v1810 = vunpack.c.l.b16 %v942
        %v1811 = vunpack.c.l.b16 %v943
        %v1812 = vunpack.c.l.b16 %v944
        %v1813 = vunpack.c.l.b16 %v945
        %v1814 = vunpack.c.l.b16 %v946
        %v1815 = vunpack.c.l.b16 %v947
        %v1816 = vunpack.c.l.b16 %v948
        %v1817 = vunpack.c.l.b16 %v949
        %v1818 = vunpack.c.l.b16 %v950
        %v1819 = vunpack.c.l.b16 %v951
        %v1820 = vunpack.c.l.b16 %v952
        %v1821 = vpack.c.b16 %v1774, %v1773
        %v1822 = vpack.c.b16 %v1776, %v1775
        %v1823 = vpack.c.b16 %v1778, %v1777
        %v1824 = vpack.c.b16 %v1780, %v1779
        %v1825 = vpack.c.b16 %v1782, %v1781
        %v1826 = vpack.c.b16 %v1784, %v1783
        %v1827 = vpack.c.b16 %v1786, %v1785
        %v1828 = vpack.c.b16 %v1788, %v1787
        %v1829 = vpack.c.b16 %v1790, %v1789
        %v1830 = vpack.c.b16 %v1792, %v1791
        %v1831 = vpack.c.b16 %v1794, %v1793
        %v1832 = vpack.c.b16 %v1796, %v1795
        %v1833 = vpack.c.b16 %v1798, %v1797
        %v1834 = vpack.c.b16 %v1800, %v1799
        %v1835 = vpack.c.b16 %v1802, %v1801
        %v1836 = vpack.c.b16 %v1804, %v1803
        %v1837 = vpack.c.b16 %v1806, %v1805
        %v1838 = vpack.c.b16 %v1808, %v1807
        %v1839 = vpack.c.b16 %v1810, %v1809
        %v1840 = vpack.c.b16 %v1812, %v1811
        %v1841 = vpack.c.b16 %v1814, %v1813
        %v1842 = vpack.c.b16 %v1816, %v1815
        %v1843 = vpack.c.b16 %v1818, %v1817
        %v1844 = vpack.c.b16 %v1820, %v1819
        %1869 = vmatprep.subr.bf16.mxu0 0
        %1870 = vmatpush1.bf16.msra.mxu0 %v1828
        %1871 = vmatprep.subr.bf16.mxu0 0
        %1872 = vmatpush1.bf16.msra.mxu0 %v1827
        %1873 = vmatprep.subr.bf16.mxu0 0
        %1874 = vmatpush1.bf16.msra.mxu0 %v1826
        %1875 = vmatprep.subr.bf16.mxu0 0
        %1876 = vmatpush1.bf16.msra.mxu0 %v1825
        %1877 = vmatprep.subr.bf16.mxu0 0
        %1878 = vmatpush1.bf16.msra.mxu0 %v1824
        %1879 = vmatprep.subr.bf16.mxu0 0
        %1880 = vmatpush1.bf16.msra.mxu0 %v1823
        %1881 = vmatprep.subr.bf16.mxu0 0
        %1882 = vmatpush1.bf16.msra.mxu0 %v1822
        %1883 = vmatprep.subr.bf16.mxu0 0
        %1884 = vmatpush1.bf16.msra.mxu0 %v1821
        %1885 = vmatprep.subr.bf16.mxu0 0
        %1886 = vmatpush2.bf16.msra.mxu0 %v1836
        %1887 = vmatprep.subr.bf16.mxu0 0
        %1888 = vmatpush2.bf16.msra.mxu0 %v1835
        %1889 = vmatprep.subr.bf16.mxu0 0
        %1890 = vmatpush2.bf16.msra.mxu0 %v1834
        %1891 = vmatprep.subr.bf16.mxu0 0
        %1892 = vmatpush2.bf16.msra.mxu0 %v1833
        %1893 = vmatprep.subr.bf16.mxu0 0
        %1894 = vmatpush2.bf16.msra.mxu0 %v1832
        %1895 = vmatprep.subr.bf16.mxu0 0
        %1896 = vmatpush2.bf16.msra.mxu0 %v1831
        %1897 = vmatprep.subr.bf16.mxu0 0
        %1898 = vmatpush2.bf16.msra.mxu0 %v1830
        %1899 = vmatprep.subr.bf16.mxu0 0
        %1900 = vmatpush2.bf16.msra.mxu0 %v1829
        %1901 = vmatprep.mubr.bf16.mxu0 %v1668
        %1902 = vmatmul.mubr.bf16.gmra.mxu0 %v1651
        %v1903 = vpop.f32.mrf.mxu0
        %v1904 = vadd.f32 %v1573, %v1903
        %v1905 = vpop.f32.mrf.mxu0
        %v1906 = vpop.f32.mrf.mxu0
        %v1907 = vadd.f32 %v1576, %v1906
        %v1908 = vpop.f32.mrf.mxu0
        %1909 = vmatprep.mubr.bf16.mxu0 %v1687
        %1910 = vmatmul.mubr.bf16.gmra.mxu0 %v1686
        %v1911 = vpop.f32.mrf.mxu0
        %v1912 = vadd.f32 %v1581, %v1911
        %v1913 = vpop.f32.mrf.mxu0
        %v1914 = vpop.f32.mrf.mxu0
        %v1915 = vadd.f32 %v1584, %v1914
        %v1916 = vpop.f32.mrf.mxu0
        %1917 = vmatprep.mubr.bf16.mxu0 %v1101
        %1918 = vmatmul.mubr.bf16.gmra.mxu0 %v1092
        %v1919 = vpop.f32.mrf.mxu0
        %v1920 = vadd.f32 %v1589, %v1919
        %v1921 = vpop.f32.mrf.mxu0
        %v1922 = vpop.f32.mrf.mxu0
        %v1923 = vadd.f32 %v1592, %v1922
        %v1924 = vpop.f32.mrf.mxu0
        %1925 = vmatprep.mubr.bf16.mxu0 %v1128
        %1926 = vmatmul.mubr.bf16.gmra.mxu0 %v1119
        %v1927 = vpop.f32.mrf.mxu0
        %v1928 = vadd.f32 %v1597, %v1927
        %v1929 = vpop.f32.mrf.mxu0
        %v1930 = vpop.f32.mrf.mxu0
        %v1931 = vadd.f32 %v1600, %v1930
        %v1932 = vpop.f32.mrf.mxu0
        %1933 = vmatprep.mubr.bf16.mxu0 %v1155
        %1934 = vmatmul.mubr.bf16.gmra.mxu0 %v1146
        %v1935 = vpop.f32.mrf.mxu0
        %v1936 = vadd.f32 %v1605, %v1935
        %v1937 = vpop.f32.mrf.mxu0
        %v1938 = vpop.f32.mrf.mxu0
        %v1939 = vadd.f32 %v1608, %v1938
        %v1940 = vpop.f32.mrf.mxu0
        %1941 = vmatprep.mubr.bf16.mxu0 %v1182
        %1942 = vmatmul.mubr.bf16.gmra.mxu0 %v1173
        %v1943 = vpop.f32.mrf.mxu0
        %v1944 = vadd.f32 %v1613, %v1943
        %v1945 = vpop.f32.mrf.mxu0
        %v1946 = vpop.f32.mrf.mxu0
        %v1947 = vadd.f32 %v1616, %v1946
        %v1948 = vpop.f32.mrf.mxu0
        %1949 = vmatprep.mubr.bf16.mxu0 %v1209
        %1950 = vmatmul.mubr.bf16.gmra.mxu0 %v1200
        %v1951 = vpop.f32.mrf.mxu0
        %v1952 = vadd.f32 %v1621, %v1951
        %v1953 = vpop.f32.mrf.mxu0
        %v1954 = vpop.f32.mrf.mxu0
        %v1955 = vadd.f32 %v1624, %v1954
        %v1956 = vpop.f32.mrf.mxu0
        %1957 = vmatprep.mubr.bf16.mxu0 %v1706
        %1958 = vmatmul.mubr.bf16.gmra.mxu0 %v1697
        %v1959 = vpop.f32.mrf.mxu0
        %v1960 = vadd.f32 %v1629, %v1959
        %v1961 = vpop.f32.mrf.mxu0
        %v1962 = vpop.f32.mrf.mxu0
        %v1963 = vadd.f32 %v1632, %v1962
        %v1964 = vpop.f32.mrf.mxu0
        %1965 = vdwg.mxu0
        %1966 = vmatprep.subr.bf16.mxu0 0
        %1967 = vmatpush1.bf16.msra.mxu0 %v1844
        %1968 = vmatprep.subr.bf16.mxu0 0
        %1969 = vmatpush1.bf16.msra.mxu0 %v1843
        %1970 = vmatprep.subr.bf16.mxu0 0
        %1971 = vmatpush1.bf16.msra.mxu0 %v1842
        %1972 = vmatprep.subr.bf16.mxu0 0
        %1973 = vmatpush1.bf16.msra.mxu0 %v1841
        %1974 = vmatprep.subr.bf16.mxu0 0
        %1975 = vmatpush1.bf16.msra.mxu0 %v1840
        %1976 = vmatprep.subr.bf16.mxu0 0
        %1977 = vmatpush1.bf16.msra.mxu0 %v1839
        %1978 = vmatprep.subr.bf16.mxu0 0
        %1979 = vmatpush1.bf16.msra.mxu0 %v1838
        %1980 = vmatprep.subr.bf16.mxu0 0
        %1981 = vmatpush1.bf16.msra.mxu0 %v1837
        %1982 = vmatprep.subr.bf16.mxu0 0
        %1983 = vmatpush2.bf16.msra.mxu0 0
        %1984 = vmatprep.subr.bf16.mxu0 0
        %1985 = vmatpush2.bf16.msra.mxu0 0
        %1986 = vmatprep.subr.bf16.mxu0 0
        %1987 = vmatpush2.bf16.msra.mxu0 0
        %1988 = vmatprep.subr.bf16.mxu0 0
        %1989 = vmatpush2.bf16.msra.mxu0 0
        %1990 = vmatprep.subr.bf16.mxu0 0
        %1991 = vmatpush2.bf16.msra.mxu0 0
        %1992 = vmatprep.subr.bf16.mxu0 0
        %1993 = vmatpush2.bf16.msra.mxu0 0
        %1994 = vmatprep.subr.bf16.mxu0 0
        %1995 = vmatpush2.bf16.msra.mxu0 0
        %1996 = vmatprep.subr.bf16.mxu0 0
        %1997 = vmatpush2.bf16.msra.mxu0 0
        %1998 = vmatprep.mubr.bf16.mxu0 0
        %1999 = vmatmul.mubr.bf16.gmra.mxu0 %v1685
        %v2000 = vpop.f32.mrf.mxu0
        %v2001 = vadd.f32 %v1904, %v2000
        %v2002 = vpop.f32.mrf.mxu0
        %v2003 = vpop.f32.mrf.mxu0
        %v2004 = vadd.f32 %v1907, %v2003
        %v2005 = vpop.f32.mrf.mxu0
        %2006 = vmatprep.mubr.bf16.mxu0 0
        %2007 = vmatmul.mubr.bf16.gmra.mxu0 %v1688
        %v2008 = vpop.f32.mrf.mxu0
        %v2009 = vadd.f32 %v1912, %v2008
        %v2010 = vpop.f32.mrf.mxu0
        %v2011 = vpop.f32.mrf.mxu0
        %v2012 = vadd.f32 %v1915, %v2011
        %v2013 = vpop.f32.mrf.mxu0
        %2014 = vmatprep.mubr.bf16.mxu0 0
        %2015 = vmatmul.mubr.bf16.gmra.mxu0 %v1110
        %v2016 = vpop.f32.mrf.mxu0
        %v2017 = vadd.f32 %v1920, %v2016
        %v2018 = vpop.f32.mrf.mxu0
        %v2019 = vpop.f32.mrf.mxu0
        %v2020 = vadd.f32 %v1923, %v2019
        %v2021 = vpop.f32.mrf.mxu0
        %2022 = vmatprep.mubr.bf16.mxu0 0
        %2023 = vmatmul.mubr.bf16.gmra.mxu0 %v1137
        %v2024 = vpop.f32.mrf.mxu0
        %v2025 = vadd.f32 %v1928, %v2024
        %v2026 = vpop.f32.mrf.mxu0
        %v2027 = vpop.f32.mrf.mxu0
        %v2028 = vadd.f32 %v1931, %v2027
        %v2029 = vpop.f32.mrf.mxu0
        %2030 = vmatprep.mubr.bf16.mxu0 0
        %2031 = vmatmul.mubr.bf16.gmra.mxu0 %v1164
        %v2032 = vpop.f32.mrf.mxu0
        %v2033 = vadd.f32 %v1936, %v2032
        %v2034 = vpop.f32.mrf.mxu0
        %v2035 = vpop.f32.mrf.mxu0
        %v2036 = vadd.f32 %v1939, %v2035
        %v2037 = vpop.f32.mrf.mxu0
        %2038 = vmatprep.mubr.bf16.mxu0 0
        %2039 = vmatmul.mubr.bf16.gmra.mxu0 %v1191
        %v2040 = vpop.f32.mrf.mxu0
        %v2041 = vadd.f32 %v1944, %v2040
        %v2042 = vpop.f32.mrf.mxu0
        %v2043 = vpop.f32.mrf.mxu0
        %v2044 = vadd.f32 %v1947, %v2043
        %v2045 = vpop.f32.mrf.mxu0
        %2046 = vmatprep.mubr.bf16.mxu0 0
        %2047 = vmatmul.mubr.bf16.gmra.mxu0 %v1218
        %v2048 = vpop.f32.mrf.mxu0
        %v2049 = vadd.f32 %v1952, %v2048
        %v2050 = vpop.f32.mrf.mxu0
        %v2051 = vpop.f32.mrf.mxu0
        %v2052 = vadd.f32 %v1955, %v2051
        %v2053 = vpop.f32.mrf.mxu0
        %2054 = vmatprep.mubr.bf16.mxu0 0
        %2055 = vmatmul.mubr.bf16.gmra.mxu0 %v1715
        %v2056 = vpop.f32.mrf.mxu0
        %v2057 = vadd.f32 %v1960, %v2056
        %v2058 = vpop.f32.mrf.mxu0
        %v2059 = vpop.f32.mrf.mxu0
        %v2060 = vadd.f32 %v1963, %v2059
        %v2061 = vpop.f32.mrf.mxu0
        %2062 = vdwg.mxu0
        %v2063 = vld [vmem:[#allocation2 + $0x10] sm:$0x8]
        %v2064 = vld [vmem:[#allocation2 + $0x14] sm:$0xf]
        %v2065 = vld [vmem:[#allocation2 + $0x18] sm:$0xf]
        %v2066 = vld [vmem:[#allocation2 + $0x1c] sm:$0xf]
        %v2067 = vld [vmem:[#allocation2 + $0x20] sm:$0xf]
        %v2068 = vld [vmem:[#allocation2 + $0x24] sm:$0xf]
        %v2069 = vld [vmem:[#allocation2 + $0x28] sm:$0xf]
        %v2070 = vld [vmem:[#allocation2 + $0x2c] sm:$0xf]
        %v2071 = vld [vmem:[#allocation2 + $0x30] sm:$0xf]
        %v2072 = vld [vmem:[#allocation2 + $0x34] sm:$0xf]
        %v2073 = vld [vmem:[#allocation2 + $0x38] sm:$0xf]
        %v2074 = vld [vmem:[#allocation2 + $0x3c] sm:$0xf]
        %v2075 = vld [vmem:[#allocation2 + $0x40] sm:$0xf]
        %v2076 = vld [vmem:[#allocation2 + $0x44] sm:$0xf]
        %v2077 = vld [vmem:[#allocation2 + $0x48] sm:$0xf]
        %v2078 = vld [vmem:[#allocation2 + $0x4c] sm:$0xf]
        %v2079 = vld [vmem:[#allocation2 + $0x50] sm:$0xf]
        %v2080 = vld [vmem:[#allocation2 + $0x14] sm:$0xf]
        %v2081 = vld [vmem:[#allocation2 + $0x18] sm:$0xf]
        %v2082 = vld [vmem:[#allocation2 + $0x1c] sm:$0xf]
        %v2083 = vld [vmem:[#allocation2 + $0x20] sm:$0xf]
        %v2084 = vld [vmem:[#allocation2 + $0x24] sm:$0xf]
        %v2085 = vld [vmem:[#allocation2 + $0x28] sm:$0xf]
        %v2086 = vld [vmem:[#allocation2 + $0x2c] sm:$0xf]
        %v2087 = vld [vmem:[#allocation2 + $0x30] sm:$0xf]
        %v2088 = vld [vmem:[#allocation2 + $0x34] sm:$0xf]
        %v2089 = vld [vmem:[#allocation2 + $0x38] sm:$0xf]
        %v2090 = vld [vmem:[#allocation2 + $0x3c] sm:$0xf]
        %v2091 = vld [vmem:[#allocation2 + $0x40] sm:$0xf]
        %v2092 = vld [vmem:[#allocation2 + $0x44] sm:$0xf]
        %v2093 = vld [vmem:[#allocation2 + $0x48] sm:$0xf]
        %v2094 = vld [vmem:[#allocation2 + $0x4c] sm:$0xf]
        %v2095 = vld [vmem:[#allocation2 + $0x50] sm:$0xf]
        %v2096 = vld [vmem:[#allocation2 + $0x54] sm:$0x1]
        %v2114 = vunpack.c.l.b16 %v2063
        %v2115 = vunpack.c.l.b16 %v2064
        %v2116 = vunpack.c.l.b16 %v2065
        %v2117 = vunpack.c.l.b16 %v2066
        %v2118 = vunpack.c.l.b16 %v2067
        %v2119 = vunpack.c.l.b16 %v2068
        %v2120 = vunpack.c.l.b16 %v2069
        %v2121 = vunpack.c.l.b16 %v2070
        %v2122 = vunpack.c.l.b16 %v2071
        %v2123 = vunpack.c.l.b16 %v2072
        %v2124 = vunpack.c.l.b16 %v2073
        %v2125 = vunpack.c.l.b16 %v2074
        %v2126 = vunpack.c.l.b16 %v2075
        %v2127 = vunpack.c.l.b16 %v2076
        %v2128 = vunpack.c.l.b16 %v2077
        %v2129 = vunpack.c.l.b16 %v2078
        %v2130 = vunpack.c.l.b16 %v2079
        %v2131 = vpack.c.b16 %v2115, %v2114
        %v2132 = vpack.c.b16 %v2117, %v2116
        %v2133 = vpack.c.b16 %v2119, %v2118
        %v2134 = vpack.c.b16 %v2121, %v2120
        %v2135 = vpack.c.b16 %v2123, %v2122
        %v2136 = vpack.c.b16 %v2125, %v2124
        %v2137 = vpack.c.b16 %v2127, %v2126
        %v2138 = vpack.c.b16 %v2129, %v2128
        %v2139 = vpack.c.b16 %v2130, %v2130
        %v2140 = vpack.c.b16 %v2116, %v2115
        %v2141 = vpack.c.b16 %v2118, %v2117
        %v2142 = vpack.c.b16 %v2120, %v2119
        %v2143 = vpack.c.b16 %v2122, %v2121
        %v2144 = vpack.c.b16 %v2124, %v2123
        %v2145 = vpack.c.b16 %v2126, %v2125
        %v2146 = vpack.c.b16 %v2128, %v2127
        %v2147 = vpack.c.b16 %v2130, %v2129
        %v2149 = vshrl.u32 %v2140, 16
        %v2151 = vrot.slane %v2149, 4
        %v2152 = vshll.u32 %v2140, 16
        %v2154 = vrot.slane %v2152, 5
        %v2155 = vor.u32 %v2151, %v2154
        %v2157 = vshrl.u32 %v2141, 16
        %v2159 = vrot.slane %v2157, 4
        %v2160 = vshll.u32 %v2141, 16
        %v2162 = vrot.slane %v2160, 5
        %v2163 = vor.u32 %v2159, %v2162
        %v2164 = vsel %vm812, %v2155, %v2163
        %v2166 = vshrl.u32 %v2142, 16
        %v2168 = vrot.slane %v2166, 4
        %v2169 = vshll.u32 %v2142, 16
        %v2171 = vrot.slane %v2169, 5
        %v2172 = vor.u32 %v2168, %v2171
        %v2173 = vsel %vm812, %v2163, %v2172
        %v2175 = vshrl.u32 %v2143, 16
        %v2177 = vrot.slane %v2175, 4
        %v2178 = vshll.u32 %v2143, 16
        %v2180 = vrot.slane %v2178, 5
        %v2181 = vor.u32 %v2177, %v2180
        %v2182 = vsel %vm812, %v2172, %v2181
        %v2184 = vshrl.u32 %v2144, 16
        %v2186 = vrot.slane %v2184, 4
        %v2187 = vshll.u32 %v2144, 16
        %v2189 = vrot.slane %v2187, 5
        %v2190 = vor.u32 %v2186, %v2189
        %v2191 = vsel %vm812, %v2181, %v2190
        %v2193 = vshrl.u32 %v2145, 16
        %v2195 = vrot.slane %v2193, 4
        %v2196 = vshll.u32 %v2145, 16
        %v2198 = vrot.slane %v2196, 5
        %v2199 = vor.u32 %v2195, %v2198
        %v2200 = vsel %vm812, %v2190, %v2199
        %v2202 = vshrl.u32 %v2146, 16
        %v2204 = vrot.slane %v2202, 4
        %v2205 = vshll.u32 %v2146, 16
        %v2207 = vrot.slane %v2205, 5
        %v2208 = vor.u32 %v2204, %v2207
        %v2209 = vsel %vm812, %v2199, %v2208
        %v2211 = vshrl.u32 %v2147, 16
        %v2213 = vrot.slane %v2211, 4
        %v2214 = vshll.u32 %v2147, 16
        %v2216 = vrot.slane %v2214, 5
        %v2217 = vor.u32 %v2213, %v2216
        %v2218 = vsel %vm812, %v2208, %v2217
        %v2236 = vunpack.c.l.b16 %v2080
        %v2237 = vunpack.c.l.b16 %v2081
        %v2238 = vunpack.c.l.b16 %v2082
        %v2239 = vunpack.c.l.b16 %v2083
        %v2240 = vunpack.c.l.b16 %v2084
        %v2241 = vunpack.c.l.b16 %v2085
        %v2242 = vunpack.c.l.b16 %v2086
        %v2243 = vunpack.c.l.b16 %v2087
        %v2244 = vunpack.c.l.b16 %v2088
        %v2245 = vunpack.c.l.b16 %v2089
        %v2246 = vunpack.c.l.b16 %v2090
        %v2247 = vunpack.c.l.b16 %v2091
        %v2248 = vunpack.c.l.b16 %v2092
        %v2249 = vunpack.c.l.b16 %v2093
        %v2250 = vunpack.c.l.b16 %v2094
        %v2251 = vunpack.c.l.b16 %v2095
        %v2252 = vunpack.c.l.b16 %v2096
        %v2253 = vpack.c.b16 %v2237, %v2236
        %v2254 = vpack.c.b16 %v2239, %v2238
        %v2255 = vpack.c.b16 %v2241, %v2240
        %v2256 = vpack.c.b16 %v2243, %v2242
        %v2257 = vpack.c.b16 %v2245, %v2244
        %v2258 = vpack.c.b16 %v2247, %v2246
        %v2259 = vpack.c.b16 %v2249, %v2248
        %v2260 = vpack.c.b16 %v2251, %v2250
        %v2261 = vpack.c.b16 %v2252, %v2252
        %v2262 = vrot.slane %v2253, 5
        %v2263 = vrot.slane %v2254, 5
        %v2264 = vsel %vm887, %v2262, %v2263
        %v2265 = vrot.slane %v2255, 5
        %v2266 = vsel %vm887, %v2263, %v2265
        %v2267 = vrot.slane %v2256, 5
        %v2268 = vsel %vm887, %v2265, %v2267
        %v2269 = vrot.slane %v2257, 5
        %v2270 = vsel %vm887, %v2267, %v2269
        %v2271 = vrot.slane %v2258, 5
        %v2272 = vsel %vm887, %v2269, %v2271
        %v2273 = vrot.slane %v2259, 5
        %v2274 = vsel %vm887, %v2271, %v2273
        %v2275 = vrot.slane %v2260, 5
        %v2276 = vsel %vm887, %v2273, %v2275
        %v2277 = vrot.slane %v2261, 5
        %v2278 = vsel %vm887, %v2275, %v2277
        %s2279 = scalar_lea.vmem [#allocation6], 384
        %v2280 = vld [vmem:[%s2279] sm:$0xf]
        %v2281 = vld [vmem:[%s2279 + $0x4] sm:$0xf]
        %v2282 = vld [vmem:[%s2279 + $0x8] sm:$0xf]
        %v2283 = vld [vmem:[%s2279 + $0xc] sm:$0xf]
        %v2284 = vld [vmem:[%s2279 + $0x10] sm:$0xf]
        %v2285 = vld [vmem:[%s2279 + $0x14] sm:$0xf]
        %v2286 = vld [vmem:[%s2279 + $0x18] sm:$0xf]
        %v2287 = vld [vmem:[%s2279 + $0x1c] sm:$0xf]
        %v2288 = vld [vmem:[%s2279 + $0x20] sm:$0xf]
        %v2289 = vld [vmem:[%s2279 + $0x24] sm:$0xf]
        %v2290 = vld [vmem:[%s2279 + $0x28] sm:$0xf]
        %v2291 = vld [vmem:[%s2279 + $0x2c] sm:$0xf]
        %v2292 = vld [vmem:[%s2279 + $0x30] sm:$0xf]
        %v2293 = vld [vmem:[%s2279 + $0x34] sm:$0xf]
        %v2294 = vld [vmem:[%s2279 + $0x38] sm:$0xf]
        %v2295 = vld [vmem:[%s2279 + $0x3c] sm:$0xf]
        %v2296 = vld [vmem:[%s2279 + $0x40] sm:$0xf]
        %v2297 = vld [vmem:[%s2279 + $0x44] sm:$0xf]
        %v2298 = vld [vmem:[%s2279 + $0x48] sm:$0xf]
        %v2299 = vld [vmem:[%s2279 + $0x4c] sm:$0xf]
        %v2300 = vld [vmem:[%s2279 + $0x50] sm:$0xf]
        %v2301 = vld [vmem:[%s2279 + $0x54] sm:$0xf]
        %v2302 = vld [vmem:[%s2279 + $0x58] sm:$0xf]
        %v2303 = vld [vmem:[%s2279 + $0x5c] sm:$0xf]
        %v2304 = vld [vmem:[%s2279 + $0x60] sm:$0xf]
        %v2305 = vld [vmem:[%s2279 + $0x64] sm:$0xf]
        %v2306 = vld [vmem:[%s2279 + $0x68] sm:$0xf]
        %v2307 = vld [vmem:[%s2279 + $0x6c] sm:$0xf]
        %v2308 = vld [vmem:[%s2279 + $0x70] sm:$0xf]
        %v2309 = vld [vmem:[%s2279 + $0x74] sm:$0xf]
        %v2310 = vld [vmem:[%s2279 + $0x78] sm:$0xf]
        %v2311 = vld [vmem:[%s2279 + $0x7c] sm:$0xf]
        %v2312 = vld [vmem:[%s2279 + $0x80] sm:$0xf]
        %v2313 = vld [vmem:[%s2279 + $0x84] sm:$0xf]
        %v2314 = vld [vmem:[%s2279 + $0x88] sm:$0xf]
        %v2315 = vld [vmem:[%s2279 + $0x8c] sm:$0xf]
        %v2316 = vld [vmem:[%s2279 + $0x90] sm:$0xf]
        %v2317 = vld [vmem:[%s2279 + $0x94] sm:$0xf]
        %v2318 = vld [vmem:[%s2279 + $0x98] sm:$0xf]
        %v2319 = vld [vmem:[%s2279 + $0x9c] sm:$0xf]
        %v2320 = vld [vmem:[%s2279 + $0xa0] sm:$0xf]
        %v2321 = vld [vmem:[%s2279 + $0xa4] sm:$0xf]
        %v2322 = vld [vmem:[%s2279 + $0xa8] sm:$0xf]
        %v2323 = vld [vmem:[%s2279 + $0xac] sm:$0xf]
        %v2324 = vld [vmem:[%s2279 + $0xb0] sm:$0xf]
        %v2325 = vld [vmem:[%s2279 + $0xb4] sm:$0xf]
        %v2326 = vld [vmem:[%s2279 + $0xb8] sm:$0xf]
        %v2327 = vld [vmem:[%s2279 + $0xbc] sm:$0xf]
        %v2329 = vshrl.u32 %v2131, 16
        %v2331 = vrot.slane %v2329, 3
        %v2332 = vshll.u32 %v2131, 16
        %v2334 = vrot.slane %v2332, 4
        %v2335 = vor.u32 %v2331, %v2334
        %v2337 = vshrl.u32 %v2132, 16
        %v2339 = vrot.slane %v2337, 3
        %v2340 = vshll.u32 %v2132, 16
        %v2342 = vrot.slane %v2340, 4
        %v2343 = vor.u32 %v2339, %v2342
        %v2344 = vsel %vm1032, %v2335, %v2343
        %v2346 = vshrl.u32 %v2155, 16
        %v2348 = vrot.slane %v2346, 3
        %v2349 = vshll.u32 %v2155, 16
        %v2351 = vrot.slane %v2349, 4
        %v2352 = vor.u32 %v2348, %v2351
        %v2354 = vshrl.u32 %v2164, 16
        %v2356 = vrot.slane %v2354, 3
        %v2357 = vshll.u32 %v2164, 16
        %v2359 = vrot.slane %v2357, 4
        %v2360 = vor.u32 %v2356, %v2359
        %v2361 = vsel %vm1032, %v2352, %v2360
        %v2363 = vshrl.u32 %v2262, 16
        %v2365 = vrot.slane %v2363, 3
        %v2366 = vshll.u32 %v2262, 16
        %v2368 = vrot.slane %v2366, 4
        %v2369 = vor.u32 %v2365, %v2368
        %v2371 = vshrl.u32 %v2264, 16
        %v2373 = vrot.slane %v2371, 3
        %v2374 = vshll.u32 %v2264, 16
        %v2376 = vrot.slane %v2374, 4
        %v2377 = vor.u32 %v2373, %v2376
        %v2378 = vsel %vm1032, %v2369, %v2377
        %v2380 = vshrl.u32 %v2133, 16
        %v2382 = vrot.slane %v2380, 3
        %v2383 = vshll.u32 %v2133, 16
        %v2385 = vrot.slane %v2383, 4
        %v2386 = vor.u32 %v2382, %v2385
        %v2387 = vsel %vm1032, %v2343, %v2386
        %v2389 = vshrl.u32 %v2173, 16
        %v2391 = vrot.slane %v2389, 3
        %v2392 = vshll.u32 %v2173, 16
        %v2394 = vrot.slane %v2392, 4
        %v2395 = vor.u32 %v2391, %v2394
        %v2396 = vsel %vm1032, %v2360, %v2395
        %v2398 = vshrl.u32 %v2266, 16
        %v2400 = vrot.slane %v2398, 3
        %v2401 = vshll.u32 %v2266, 16
        %v2403 = vrot.slane %v2401, 4
        %v2404 = vor.u32 %v2400, %v2403
        %v2405 = vsel %vm1032, %v2377, %v2404
        %v2407 = vshrl.u32 %v2134, 16
        %v2409 = vrot.slane %v2407, 3
        %v2410 = vshll.u32 %v2134, 16
        %v2412 = vrot.slane %v2410, 4
        %v2413 = vor.u32 %v2409, %v2412
        %v2414 = vsel %vm1032, %v2386, %v2413
        %v2416 = vshrl.u32 %v2182, 16
        %v2418 = vrot.slane %v2416, 3
        %v2419 = vshll.u32 %v2182, 16
        %v2421 = vrot.slane %v2419, 4
        %v2422 = vor.u32 %v2418, %v2421
        %v2423 = vsel %vm1032, %v2395, %v2422
        %v2425 = vshrl.u32 %v2268, 16
        %v2427 = vrot.slane %v2425, 3
        %v2428 = vshll.u32 %v2268, 16
        %v2430 = vrot.slane %v2428, 4
        %v2431 = vor.u32 %v2427, %v2430
        %v2432 = vsel %vm1032, %v2404, %v2431
        %v2434 = vshrl.u32 %v2135, 16
        %v2436 = vrot.slane %v2434, 3
        %v2437 = vshll.u32 %v2135, 16
        %v2439 = vrot.slane %v2437, 4
        %v2440 = vor.u32 %v2436, %v2439
        %v2441 = vsel %vm1032, %v2413, %v2440
        %v2443 = vshrl.u32 %v2191, 16
        %v2445 = vrot.slane %v2443, 3
        %v2446 = vshll.u32 %v2191, 16
        %v2448 = vrot.slane %v2446, 4
        %v2449 = vor.u32 %v2445, %v2448
        %v2450 = vsel %vm1032, %v2422, %v2449
        %v2452 = vshrl.u32 %v2270, 16
        %v2454 = vrot.slane %v2452, 3
        %v2455 = vshll.u32 %v2270, 16
        %v2457 = vrot.slane %v2455, 4
        %v2458 = vor.u32 %v2454, %v2457
        %v2459 = vsel %vm1032, %v2431, %v2458
        %v2461 = vshrl.u32 %v2136, 16
        %v2463 = vrot.slane %v2461, 3
        %v2464 = vshll.u32 %v2136, 16
        %v2466 = vrot.slane %v2464, 4
        %v2467 = vor.u32 %v2463, %v2466
        %v2468 = vsel %vm1032, %v2440, %v2467
        %v2470 = vshrl.u32 %v2200, 16
        %v2472 = vrot.slane %v2470, 3
        %v2473 = vshll.u32 %v2200, 16
        %v2475 = vrot.slane %v2473, 4
        %v2476 = vor.u32 %v2472, %v2475
        %v2477 = vsel %vm1032, %v2449, %v2476
        %v2479 = vshrl.u32 %v2272, 16
        %v2481 = vrot.slane %v2479, 3
        %v2482 = vshll.u32 %v2272, 16
        %v2484 = vrot.slane %v2482, 4
        %v2485 = vor.u32 %v2481, %v2484
        %v2486 = vsel %vm1032, %v2458, %v2485
        %v2488 = vshrl.u32 %v2137, 16
        %v2490 = vrot.slane %v2488, 3
        %v2491 = vshll.u32 %v2137, 16
        %v2493 = vrot.slane %v2491, 4
        %v2494 = vor.u32 %v2490, %v2493
        %v2495 = vsel %vm1032, %v2467, %v2494
        %v2497 = vshrl.u32 %v2209, 16
        %v2499 = vrot.slane %v2497, 3
        %v2500 = vshll.u32 %v2209, 16
        %v2502 = vrot.slane %v2500, 4
        %v2503 = vor.u32 %v2499, %v2502
        %v2504 = vsel %vm1032, %v2476, %v2503
        %v2506 = vshrl.u32 %v2274, 16
        %v2508 = vrot.slane %v2506, 3
        %v2509 = vshll.u32 %v2274, 16
        %v2511 = vrot.slane %v2509, 4
        %v2512 = vor.u32 %v2508, %v2511
        %v2513 = vsel %vm1032, %v2485, %v2512
        %v2515 = vshrl.u32 %v2138, 16
        %v2517 = vrot.slane %v2515, 3
        %v2518 = vshll.u32 %v2138, 16
        %v2520 = vrot.slane %v2518, 4
        %v2521 = vor.u32 %v2517, %v2520
        %v2522 = vsel %vm1032, %v2494, %v2521
        %v2524 = vshrl.u32 %v2218, 16
        %v2526 = vrot.slane %v2524, 3
        %v2527 = vshll.u32 %v2218, 16
        %v2529 = vrot.slane %v2527, 4
        %v2530 = vor.u32 %v2526, %v2529
        %v2531 = vsel %vm1032, %v2503, %v2530
        %v2533 = vshrl.u32 %v2276, 16
        %v2535 = vrot.slane %v2533, 3
        %v2536 = vshll.u32 %v2276, 16
        %v2538 = vrot.slane %v2536, 4
        %v2539 = vor.u32 %v2535, %v2538
        %v2540 = vsel %vm1032, %v2512, %v2539
        %v2542 = vshrl.u32 %v2139, 16
        %v2544 = vrot.slane %v2542, 3
        %v2545 = vshll.u32 %v2139, 16
        %v2547 = vrot.slane %v2545, 4
        %v2548 = vor.u32 %v2544, %v2547
        %v2549 = vsel %vm1032, %v2521, %v2548
        %v2551 = vshrl.u32 %v2217, 16
        %v2553 = vrot.slane %v2551, 3
        %v2554 = vshll.u32 %v2217, 16
        %v2556 = vrot.slane %v2554, 4
        %v2557 = vor.u32 %v2553, %v2556
        %v2558 = vsel %vm1032, %v2530, %v2557
        %v2560 = vshrl.u32 %v2278, 16
        %v2562 = vrot.slane %v2560, 3
        %v2563 = vshll.u32 %v2278, 16
        %v2565 = vrot.slane %v2563, 4
        %v2566 = vor.u32 %v2562, %v2565
        %v2567 = vsel %vm1032, %v2539, %v2566
        %v2640 = vunpack.c.l.b16 %v2280
        %v2641 = vunpack.c.l.b16 %v2281
        %v2642 = vunpack.c.l.b16 %v2282
        %v2643 = vunpack.c.l.b16 %v2283
        %v2644 = vunpack.c.l.b16 %v2284
        %v2645 = vunpack.c.l.b16 %v2285
        %v2646 = vunpack.c.l.b16 %v2286
        %v2647 = vunpack.c.l.b16 %v2287
        %v2648 = vunpack.c.l.b16 %v2288
        %v2649 = vunpack.c.l.b16 %v2289
        %v2650 = vunpack.c.l.b16 %v2290
        %v2651 = vunpack.c.l.b16 %v2291
        %v2652 = vunpack.c.l.b16 %v2292
        %v2653 = vunpack.c.l.b16 %v2293
        %v2654 = vunpack.c.l.b16 %v2294
        %v2655 = vunpack.c.l.b16 %v2295
        %v2656 = vunpack.c.l.b16 %v2296
        %v2657 = vunpack.c.l.b16 %v2297
        %v2658 = vunpack.c.l.b16 %v2298
        %v2659 = vunpack.c.l.b16 %v2299
        %v2660 = vunpack.c.l.b16 %v2300
        %v2661 = vunpack.c.l.b16 %v2301
        %v2662 = vunpack.c.l.b16 %v2302
        %v2663 = vunpack.c.l.b16 %v2303
        %v2664 = vunpack.c.l.b16 %v2304
        %v2665 = vunpack.c.l.b16 %v2305
        %v2666 = vunpack.c.l.b16 %v2306
        %v2667 = vunpack.c.l.b16 %v2307
        %v2668 = vunpack.c.l.b16 %v2308
        %v2669 = vunpack.c.l.b16 %v2309
        %v2670 = vunpack.c.l.b16 %v2310
        %v2671 = vunpack.c.l.b16 %v2311
        %v2672 = vunpack.c.l.b16 %v2312
        %v2673 = vunpack.c.l.b16 %v2313
        %v2674 = vunpack.c.l.b16 %v2314
        %v2675 = vunpack.c.l.b16 %v2315
        %v2676 = vunpack.c.l.b16 %v2316
        %v2677 = vunpack.c.l.b16 %v2317
        %v2678 = vunpack.c.l.b16 %v2318
        %v2679 = vunpack.c.l.b16 %v2319
        %v2680 = vunpack.c.l.b16 %v2320
        %v2681 = vunpack.c.l.b16 %v2321
        %v2682 = vunpack.c.l.b16 %v2322
        %v2683 = vunpack.c.l.b16 %v2323
        %v2684 = vunpack.c.l.b16 %v2324
        %v2685 = vunpack.c.l.b16 %v2325
        %v2686 = vunpack.c.l.b16 %v2326
        %v2687 = vunpack.c.l.b16 %v2327
        %v2688 = vpack.c.b16 %v2641, %v2640
        %v2689 = vpack.c.b16 %v2643, %v2642
        %v2690 = vpack.c.b16 %v2645, %v2644
        %v2691 = vpack.c.b16 %v2647, %v2646
        %v2692 = vpack.c.b16 %v2649, %v2648
        %v2693 = vpack.c.b16 %v2651, %v2650
        %v2694 = vpack.c.b16 %v2653, %v2652
        %v2695 = vpack.c.b16 %v2655, %v2654
        %v2696 = vpack.c.b16 %v2657, %v2656
        %v2697 = vpack.c.b16 %v2659, %v2658
        %v2698 = vpack.c.b16 %v2661, %v2660
        %v2699 = vpack.c.b16 %v2663, %v2662
        %v2700 = vpack.c.b16 %v2665, %v2664
        %v2701 = vpack.c.b16 %v2667, %v2666
        %v2702 = vpack.c.b16 %v2669, %v2668
        %v2703 = vpack.c.b16 %v2671, %v2670
        %v2704 = vpack.c.b16 %v2673, %v2672
        %v2705 = vpack.c.b16 %v2675, %v2674
        %v2706 = vpack.c.b16 %v2677, %v2676
        %v2707 = vpack.c.b16 %v2679, %v2678
        %v2708 = vpack.c.b16 %v2681, %v2680
        %v2709 = vpack.c.b16 %v2683, %v2682
        %v2710 = vpack.c.b16 %v2685, %v2684
        %v2711 = vpack.c.b16 %v2687, %v2686
        %2736 = vmatprep.subr.bf16.mxu0 0
        %2737 = vmatpush1.bf16.msra.mxu0 %v2695
        %2738 = vmatprep.subr.bf16.mxu0 0
        %2739 = vmatpush1.bf16.msra.mxu0 %v2694
        %2740 = vmatprep.subr.bf16.mxu0 0
        %2741 = vmatpush1.bf16.msra.mxu0 %v2693
        %2742 = vmatprep.subr.bf16.mxu0 0
        %2743 = vmatpush1.bf16.msra.mxu0 %v2692
        %2744 = vmatprep.subr.bf16.mxu0 0
        %2745 = vmatpush1.bf16.msra.mxu0 %v2691
        %2746 = vmatprep.subr.bf16.mxu0 0
        %2747 = vmatpush1.bf16.msra.mxu0 %v2690
        %2748 = vmatprep.subr.bf16.mxu0 0
        %2749 = vmatpush1.bf16.msra.mxu0 %v2689
        %2750 = vmatprep.subr.bf16.mxu0 0
        %2751 = vmatpush1.bf16.msra.mxu0 %v2688
        %2752 = vmatprep.subr.bf16.mxu0 0
        %2753 = vmatpush2.bf16.msra.mxu0 %v2703
        %2754 = vmatprep.subr.bf16.mxu0 0
        %2755 = vmatpush2.bf16.msra.mxu0 %v2702
        %2756 = vmatprep.subr.bf16.mxu0 0
        %2757 = vmatpush2.bf16.msra.mxu0 %v2701
        %2758 = vmatprep.subr.bf16.mxu0 0
        %2759 = vmatpush2.bf16.msra.mxu0 %v2700
        %2760 = vmatprep.subr.bf16.mxu0 0
        %2761 = vmatpush2.bf16.msra.mxu0 %v2699
        %2762 = vmatprep.subr.bf16.mxu0 0
        %2763 = vmatpush2.bf16.msra.mxu0 %v2698
        %2764 = vmatprep.subr.bf16.mxu0 0
        %2765 = vmatpush2.bf16.msra.mxu0 %v2697
        %2766 = vmatprep.subr.bf16.mxu0 0
        %2767 = vmatpush2.bf16.msra.mxu0 %v2696
        %2768 = vmatprep.mubr.bf16.mxu0 %v2361
        %2769 = vmatmul.mubr.bf16.gmra.mxu0 %v2344
        %v2770 = vpop.f32.mrf.mxu0
        %v2771 = vadd.f32 0.0, %v2770
        %v2772 = vpop.f32.mrf.mxu0
        %v2773 = vpop.f32.mrf.mxu0
        %v2774 = vadd.f32 0.0, %v2773
        %v2775 = vpop.f32.mrf.mxu0
        %2776 = vmatprep.mubr.bf16.mxu0 %v2396
        %2777 = vmatmul.mubr.bf16.gmra.mxu0 %v2387
        %v2778 = vpop.f32.mrf.mxu0
        %v2779 = vadd.f32 0.0, %v2778
        %v2780 = vpop.f32.mrf.mxu0
        %v2781 = vpop.f32.mrf.mxu0
        %v2782 = vadd.f32 0.0, %v2781
        %v2783 = vpop.f32.mrf.mxu0
        %2784 = vmatprep.mubr.bf16.mxu0 %v2423
        %2785 = vmatmul.mubr.bf16.gmra.mxu0 %v2414
        %v2786 = vpop.f32.mrf.mxu0
        %v2787 = vadd.f32 0.0, %v2786
        %v2788 = vpop.f32.mrf.mxu0
        %v2789 = vpop.f32.mrf.mxu0
        %v2790 = vadd.f32 0.0, %v2789
        %v2791 = vpop.f32.mrf.mxu0
        %2792 = vmatprep.mubr.bf16.mxu0 %v2450
        %2793 = vmatmul.mubr.bf16.gmra.mxu0 %v2441
        %v2794 = vpop.f32.mrf.mxu0
        %v2795 = vadd.f32 0.0, %v2794
        %v2796 = vpop.f32.mrf.mxu0
        %v2797 = vpop.f32.mrf.mxu0
        %v2798 = vadd.f32 0.0, %v2797
        %v2799 = vpop.f32.mrf.mxu0
        %2800 = vmatprep.mubr.bf16.mxu0 %v2477
        %2801 = vmatmul.mubr.bf16.gmra.mxu0 %v2468
        %v2802 = vpop.f32.mrf.mxu0
        %v2803 = vadd.f32 0.0, %v2802
        %v2804 = vpop.f32.mrf.mxu0
        %v2805 = vpop.f32.mrf.mxu0
        %v2806 = vadd.f32 0.0, %v2805
        %v2807 = vpop.f32.mrf.mxu0
        %2808 = vmatprep.mubr.bf16.mxu0 %v2504
        %2809 = vmatmul.mubr.bf16.gmra.mxu0 %v2495
        %v2810 = vpop.f32.mrf.mxu0
        %v2811 = vadd.f32 0.0, %v2810
        %v2812 = vpop.f32.mrf.mxu0
        %v2813 = vpop.f32.mrf.mxu0
        %v2814 = vadd.f32 0.0, %v2813
        %v2815 = vpop.f32.mrf.mxu0
        %2816 = vmatprep.mubr.bf16.mxu0 %v2531
        %2817 = vmatmul.mubr.bf16.gmra.mxu0 %v2522
        %v2818 = vpop.f32.mrf.mxu0
        %v2819 = vadd.f32 0.0, %v2818
        %v2820 = vpop.f32.mrf.mxu0
        %v2821 = vpop.f32.mrf.mxu0
        %v2822 = vadd.f32 0.0, %v2821
        %v2823 = vpop.f32.mrf.mxu0
        %2824 = vmatprep.mubr.bf16.mxu0 %v2558
        %2825 = vmatmul.mubr.bf16.gmra.mxu0 %v2549
        %v2826 = vpop.f32.mrf.mxu0
        %v2827 = vadd.f32 0.0, %v2826
        %v2828 = vpop.f32.mrf.mxu0
        %v2829 = vpop.f32.mrf.mxu0
        %v2830 = vadd.f32 0.0, %v2829
        %v2831 = vpop.f32.mrf.mxu0
        %2832 = vdwg.mxu0
        %2833 = vmatprep.subr.bf16.mxu0 0
        %2834 = vmatpush1.bf16.msra.mxu0 %v2711
        %2835 = vmatprep.subr.bf16.mxu0 0
        %2836 = vmatpush1.bf16.msra.mxu0 %v2710
        %2837 = vmatprep.subr.bf16.mxu0 0
        %2838 = vmatpush1.bf16.msra.mxu0 %v2709
        %2839 = vmatprep.subr.bf16.mxu0 0
        %2840 = vmatpush1.bf16.msra.mxu0 %v2708
        %2841 = vmatprep.subr.bf16.mxu0 0
        %2842 = vmatpush1.bf16.msra.mxu0 %v2707
        %2843 = vmatprep.subr.bf16.mxu0 0
        %2844 = vmatpush1.bf16.msra.mxu0 %v2706
        %2845 = vmatprep.subr.bf16.mxu0 0
        %2846 = vmatpush1.bf16.msra.mxu0 %v2705
        %2847 = vmatprep.subr.bf16.mxu0 0
        %2848 = vmatpush1.bf16.msra.mxu0 %v2704
        %2849 = vmatprep.subr.bf16.mxu0 0
        %2850 = vmatpush2.bf16.msra.mxu0 0
        %2851 = vmatprep.subr.bf16.mxu0 0
        %2852 = vmatpush2.bf16.msra.mxu0 0
        %2853 = vmatprep.subr.bf16.mxu0 0
        %2854 = vmatpush2.bf16.msra.mxu0 0
        %2855 = vmatprep.subr.bf16.mxu0 0
        %2856 = vmatpush2.bf16.msra.mxu0 0
        %2857 = vmatprep.subr.bf16.mxu0 0
        %2858 = vmatpush2.bf16.msra.mxu0 0
        %2859 = vmatprep.subr.bf16.mxu0 0
        %2860 = vmatpush2.bf16.msra.mxu0 0
        %2861 = vmatprep.subr.bf16.mxu0 0
        %2862 = vmatpush2.bf16.msra.mxu0 0
        %2863 = vmatprep.subr.bf16.mxu0 0
        %2864 = vmatpush2.bf16.msra.mxu0 0
        %2865 = vmatprep.mubr.bf16.mxu0 0
        %2866 = vmatmul.mubr.bf16.gmra.mxu0 %v2378
        %v2867 = vpop.f32.mrf.mxu0
        %v2868 = vadd.f32 %v2771, %v2867
        %v2869 = vpop.f32.mrf.mxu0
        %v2870 = vpop.f32.mrf.mxu0
        %v2871 = vadd.f32 %v2774, %v2870
        %v2872 = vpop.f32.mrf.mxu0
        %2873 = vmatprep.mubr.bf16.mxu0 0
        %2874 = vmatmul.mubr.bf16.gmra.mxu0 %v2405
        %v2875 = vpop.f32.mrf.mxu0
        %v2876 = vadd.f32 %v2779, %v2875
        %v2877 = vpop.f32.mrf.mxu0
        %v2878 = vpop.f32.mrf.mxu0
        %v2879 = vadd.f32 %v2782, %v2878
        %v2880 = vpop.f32.mrf.mxu0
        %2881 = vmatprep.mubr.bf16.mxu0 0
        %2882 = vmatmul.mubr.bf16.gmra.mxu0 %v2432
        %v2883 = vpop.f32.mrf.mxu0
        %v2884 = vadd.f32 %v2787, %v2883
        %v2885 = vpop.f32.mrf.mxu0
        %v2886 = vpop.f32.mrf.mxu0
        %v2887 = vadd.f32 %v2790, %v2886
        %v2888 = vpop.f32.mrf.mxu0
        %2889 = vmatprep.mubr.bf16.mxu0 0
        %2890 = vmatmul.mubr.bf16.gmra.mxu0 %v2459
        %v2891 = vpop.f32.mrf.mxu0
        %v2892 = vadd.f32 %v2795, %v2891
        %v2893 = vpop.f32.mrf.mxu0
        %v2894 = vpop.f32.mrf.mxu0
        %v2895 = vadd.f32 %v2798, %v2894
        %v2896 = vpop.f32.mrf.mxu0
        %2897 = vmatprep.mubr.bf16.mxu0 0
        %2898 = vmatmul.mubr.bf16.gmra.mxu0 %v2486
        %v2899 = vpop.f32.mrf.mxu0
        %v2900 = vadd.f32 %v2803, %v2899
        %v2901 = vpop.f32.mrf.mxu0
        %v2902 = vpop.f32.mrf.mxu0
        %v2903 = vadd.f32 %v2806, %v2902
        %v2904 = vpop.f32.mrf.mxu0
        %2905 = vmatprep.mubr.bf16.mxu0 0
        %2906 = vmatmul.mubr.bf16.gmra.mxu0 %v2513
        %v2907 = vpop.f32.mrf.mxu0
        %v2908 = vadd.f32 %v2811, %v2907
        %v2909 = vpop.f32.mrf.mxu0
        %v2910 = vpop.f32.mrf.mxu0
        %v2911 = vadd.f32 %v2814, %v2910
        %v2912 = vpop.f32.mrf.mxu0
        %2913 = vmatprep.mubr.bf16.mxu0 0
        %2914 = vmatmul.mubr.bf16.gmra.mxu0 %v2540
        %v2915 = vpop.f32.mrf.mxu0
        %v2916 = vadd.f32 %v2819, %v2915
        %v2917 = vpop.f32.mrf.mxu0
        %v2918 = vpop.f32.mrf.mxu0
        %v2919 = vadd.f32 %v2822, %v2918
        %v2920 = vpop.f32.mrf.mxu0
        %2921 = vmatprep.mubr.bf16.mxu0 0
        %2922 = vmatmul.mubr.bf16.gmra.mxu0 %v2567
        %v2923 = vpop.f32.mrf.mxu0
        %v2924 = vadd.f32 %v2827, %v2923
        %v2925 = vpop.f32.mrf.mxu0
        %v2926 = vpop.f32.mrf.mxu0
        %v2927 = vadd.f32 %v2830, %v2926
        %v2928 = vpop.f32.mrf.mxu0
        %2929 = vdwg.mxu0
        %v2930 = vadd.f32 %v2001, %v2868
        %v2931 = vadd.f32 %v2004, %v2871
        %v2932 = vadd.f32 %v2009, %v2876
        %v2933 = vadd.f32 %v2012, %v2879
        %v2934 = vadd.f32 %v2017, %v2884
        %v2935 = vadd.f32 %v2020, %v2887
        %v2936 = vadd.f32 %v2025, %v2892
        %v2937 = vadd.f32 %v2028, %v2895
        %v2938 = vadd.f32 %v2033, %v2900
        %v2939 = vadd.f32 %v2036, %v2903
        %v2940 = vadd.f32 %v2041, %v2908
        %v2941 = vadd.f32 %v2044, %v2911
        %v2942 = vadd.f32 %v2049, %v2916
        %v2943 = vadd.f32 %v2052, %v2919
        %v2944 = vadd.f32 %v2057, %v2924
        %v2945 = vadd.f32 %v2060, %v2927
        %v2946 = vld [vmem:[%s5] sm:$0x1]
        %v2948 = vlaneseq
        %v2949 = vshrl.u32 %v2948, 7
        %v2950 = vsub.s32 0, %v2949
        %v2951 = vrot.slane %v2946, %v2950
        %v2953 = vadd.f32 %v2930, %v2951
        %v2954 = vadd.f32 %v2931, %v2951
        %v2955 = vadd.f32 %v2932, %v2951
        %v2956 = vadd.f32 %v2933, %v2951
        %v2957 = vadd.f32 %v2934, %v2951
        %v2958 = vadd.f32 %v2935, %v2951
        %v2959 = vadd.f32 %v2936, %v2951
        %v2960 = vadd.f32 %v2937, %v2951
        %v2961 = vadd.f32 %v2938, %v2951
        %v2962 = vadd.f32 %v2939, %v2951
        %v2963 = vadd.f32 %v2940, %v2951
        %v2964 = vadd.f32 %v2941, %v2951
        %v2965 = vadd.f32 %v2942, %v2951
        %v2966 = vadd.f32 %v2943, %v2951
        %v2967 = vadd.f32 %v2944, %v2951
        %v2968 = vadd.f32 %v2945, %v2951
        %v2969 = vmax.f32 %v2953, 0.0
        %v2970 = vmax.f32 %v2954, 0.0
        %v2971 = vmax.f32 %v2955, 0.0
        %v2972 = vmax.f32 %v2956, 0.0
        %v2973 = vmax.f32 %v2957, 0.0
        %v2974 = vmax.f32 %v2958, 0.0
        %v2975 = vmax.f32 %v2959, 0.0
        %v2976 = vmax.f32 %v2960, 0.0
        %v2977 = vmax.f32 %v2961, 0.0
        %v2978 = vmax.f32 %v2962, 0.0
        %v2979 = vmax.f32 %v2963, 0.0
        %v2980 = vmax.f32 %v2964, 0.0
        %v2981 = vmax.f32 %v2965, 0.0
        %v2982 = vmax.f32 %v2966, 0.0
        %v2983 = vmax.f32 %v2967, 0.0
        %v2984 = vmax.f32 %v2968, 0.0
        %v2985 = vpack.c.bf16 %v2970, %v2969
        %v2986 = vpack.c.bf16 %v2972, %v2971
        %v2987 = vpack.c.bf16 %v2974, %v2973
        %v2988 = vpack.c.bf16 %v2976, %v2975
        %v2989 = vpack.c.bf16 %v2978, %v2977
        %v2990 = vpack.c.bf16 %v2980, %v2979
        %v2991 = vpack.c.bf16 %v2982, %v2981
        %v2992 = vpack.c.bf16 %v2984, %v2983
        %v3001 = vunpack.c.l.b16 %v2985
        %v3002 = vunpack.c.h.b16 %v2985
        %v3003 = vunpack.c.l.b16 %v2986
        %v3004 = vunpack.c.h.b16 %v2986
        %v3005 = vunpack.c.l.b16 %v2987
        %v3006 = vunpack.c.h.b16 %v2987
        %v3007 = vunpack.c.l.b16 %v2988
        %v3008 = vunpack.c.h.b16 %v2988
        %v3009 = vunpack.c.l.b16 %v2989
        %v3010 = vunpack.c.h.b16 %v2989
        %v3011 = vunpack.c.l.b16 %v2990
        %v3012 = vunpack.c.h.b16 %v2990
        %v3013 = vunpack.c.l.b16 %v2991
        %v3014 = vunpack.c.h.b16 %v2991
        %v3015 = vunpack.c.l.b16 %v2992
        %v3016 = vunpack.c.h.b16 %v2992
        %v3017 = vpack.c.b16 %v3001, %v3001
        %v3018 = vpack.c.b16 %v3002, %v3002
        %v3019 = vpack.c.b16 %v3003, %v3003
        %v3020 = vpack.c.b16 %v3004, %v3004
        %v3021 = vpack.c.b16 %v3005, %v3005
        %v3022 = vpack.c.b16 %v3006, %v3006
        %v3023 = vpack.c.b16 %v3007, %v3007
        %v3024 = vpack.c.b16 %v3008, %v3008
        %v3025 = vpack.c.b16 %v3009, %v3009
        %v3026 = vpack.c.b16 %v3010, %v3010
        %v3027 = vpack.c.b16 %v3011, %v3011
        %v3028 = vpack.c.b16 %v3012, %v3012
        %v3029 = vpack.c.b16 %v3013, %v3013
        %v3030 = vpack.c.b16 %v3014, %v3014
        %v3031 = vpack.c.b16 %v3015, %v3015
        %v3032 = vpack.c.b16 %v3016, %v3016
        %3049 = vst [vmem:[%s274] sm:$0xf] %v3017
        %3050 = vst [vmem:[%s274 + $0x4] sm:$0xf] %v3018
        %3051 = vst [vmem:[%s274 + $0x8] sm:$0xf] %v3019
        %3052 = vst [vmem:[%s274 + $0xc] sm:$0xf] %v3020
        %3053 = vst [vmem:[%s274 + $0x10] sm:$0xf] %v3021
        %3054 = vst [vmem:[%s274 + $0x14] sm:$0xf] %v3022
        %3055 = vst [vmem:[%s274 + $0x18] sm:$0xf] %v3023
        %3056 = vst [vmem:[%s274 + $0x1c] sm:$0xf] %v3024
        %3057 = vst [vmem:[%s274 + $0x20] sm:$0xf] %v3025
        %3058 = vst [vmem:[%s274 + $0x24] sm:$0xf] %v3026
        %3059 = vst [vmem:[%s274 + $0x28] sm:$0xf] %v3027
        %3060 = vst [vmem:[%s274 + $0x2c] sm:$0xf] %v3028
        %3061 = vst [vmem:[%s274 + $0x30] sm:$0xf] %v3029
        %3062 = vst [vmem:[%s274 + $0x34] sm:$0xf] %v3030
        %3063 = vst [vmem:[%s274 + $0x38] sm:$0xf] %v3031
        %3064 = vst [vmem:[%s274 + $0x3c] sm:$0xf] %v3032
        %s3065 = sand.u32 %s161, 1
        %s3066 = scalar_lea.sflag [#allocation5], %s3065
        %s3067 = sand.u32 %s161, 1
        %s3068 = smul.addr %s3067, 64
        %s3069 = scalar_lea.vmem [#allocation8], %s3068
        // Predicated region
        $region53: #{tpu_custom_call.1} parent=43 // pred_check
          %p3070 = pneg %p171
        $region54: #{tpu_custom_call.1} parent=43 // pred_check_branch
          %3072 = sbr.rel (%p3070) target = $region56
        $region55: #{tpu_custom_call.1} parent=43 // pred_region
          %s3074 = ssub.s32 1024, 1024
          %3075 = vsyncadd %s3066, %s3074
          %s3076 = smul.addr %s22, 16
          %s3077 = smul.addr %s3076, 64
          %s3078 = scalar_lea.hbm %s6, %s3077
          %s3079 = sshll.u32 %s3069, 4
          %s3080 = int_to_ptr.vmem [resolvable:$true] %s3079
          %3085 = dma.vmem_to_hbm [thread:$0]  %s3080, 1024, %s3078, %s3066, 64, 64, 4
        $region56: #{tpu_custom_call.1} parent=43 // pred_fallthru
          _
      $region44: #{tpu_custom_call.1} parent=5 // pred_fallthru
        _
      %p3086 = scmp.le.s32.totalorder 2, %s17
      // Predicated region
      $region57: #{tpu_custom_call.1} parent=5 // pred_check
        %p3087 = pneg %p3086
      $region58: #{tpu_custom_call.1} parent=5 // pred_check_branch
        %3089 = sbr.rel (%p3087) target = $region60
      $region59: #{tpu_custom_call.1} parent=5 // pred_region
        %s3090 = ssub.s32 %s17, 2
        // Predicated region
        $region61: #{tpu_custom_call.1} parent=59 // pred_check
          %p3091 = pneg %p177
        $region62: #{tpu_custom_call.1} parent=59 // pred_check_branch
          %3093 = sbr.rel (%p3091) target = $region64
        $region63: #{tpu_custom_call.1} parent=59 // pred_region
          %s3094 = sand.u32 %s162, 1
          %s3095 = scalar_lea.sflag [#allocation5], %s3094
          %s3096 = sand.u32 %s162, 1
          %s3097 = smul.addr %s3096, 64
          %s3098 = scalar_lea.vmem [#allocation8], %s3097
          %3099 = dma.done %s3095, 1024
        $region64: #{tpu_custom_call.1} parent=59 // pred_fallthru
          _
      $region60: #{tpu_custom_call.1} parent=5 // pred_fallthru
        _
    $region6: #{tpu_custom_call.1} parent=1 // loop_footer
      %s21 = sadd.s32 1, %s17
    $region7: #{tpu_custom_call.1} parent=1 // loop_footer_branch
      %16 = sbr.rel target = $region3
    $region8: #{tpu_custom_call.1} parent=1 // loop_exit
      _
    %3100 = vsyncpa [#allocation4], 1
    %s3101 = scalar_lea.sflag [#allocation4], 1
    %3102 = vsyncpa %s3101, 1
    %3103 = vsyncpa [#allocation7], 1
    %3104 = vsyncpa [#allocation5], 1
    %s3105 = scalar_lea.sflag [#allocation5], 1
    %3106 = vsyncpa %s3105, 1

</llo_original>
